<compile_context>
chip_gen: v5e
topology: v5e:2x2
jax: 0.10.0
libtpu: 0.0.40
codegen_flags: <defaults>
</compile_context>

<pallas_src>
import math
import functools

import jax
import jax.numpy as jnp
from jax.experimental import pallas as pl
from jax.experimental.pallas import tpu as pltpu


# ----------------------------------------------------------------------------
# In-kernel math helpers (all f32 elementwise; safe on v5e which lacks bf16 VPU)
# ----------------------------------------------------------------------------

_LN_EPS = 1e-12


def _ln(h, g, b, eps=_LN_EPS):
    mu = jnp.mean(h, axis=-1, keepdims=True)
    var = jnp.mean(jnp.square(h - mu), axis=-1, keepdims=True)
    return (h - mu) * jax.lax.rsqrt(var + eps) * g + b


def _erf_approx(x):
    # Abramowitz & Stegun 7.1.26, |err| < 1.5e-7 (f32-exact for BERT's erf-GELU).
    # Uses only exp/mul/add/select so it lowers to VPU+EUP on every TPU generation.
    a = jnp.abs(x)
    t = 1.0 / (1.0 + 0.3275911 * a)
    poly = t * (0.254829592 + t * (-0.284496736 + t * (1.421413741
            + t * (-1.453152027 + t * 1.061405429))))
    r = 1.0 - poly * jnp.exp(-a * a)
    return jnp.where(x < 0.0, -r, r)


def _gelu_exact(x):
    return 0.5 * x * (1.0 + _erf_approx(x * 0.7071067811865476))


# ----------------------------------------------------------------------------
# Fully fused forward kernel: grid = (batch_tiles, num_layers)
# ----------------------------------------------------------------------------

def _fused_forward_kernel(emb_ref, pos_tok_ref, bias_ref,
                          wqkv_ref, bqkv_ref, wo_ref, w1_ref, b1_ref, w2_ref,
                          vec_ref, embln_ref, pool_w_ref, pool_b_ref,
                          heads_w_ref, heads_b_ref,
                          out_ref, h_sc,
                          *, batch_tile, seq, num_heads, head_dim):
    f32, bf16 = jnp.float32, jnp.bfloat16
    S = seq
    H = num_heads * head_dim
    M = batch_tile * S                       # batch folded into matmul M dim
    l = pl.program_id(1)

    # ---- layer step 0: word + (pos + type) embedding add, then LayerNorm ----
    @pl.when(l == 0)
    def _():
        pt = pos_tok_ref[...]                                     # (S, H)
        if batch_tile > 1:
            pt = jnp.concatenate([pt] * batch_tile, axis=0)       # (M, H)
        e = emb_ref[...] + pt
        h_sc[...] = _ln(e, embln_ref[0:1, :], embln_ref[1:2, :])

    x = h_sc[...]                             # (M, H) f32, VMEM-resident across layers
    vecs = vec_ref[0]                         # (6, H): [bo, ln1_g, ln1_b, b2, ln2_g, ln2_b]

    # ---- fused QKV projection: one [M,H] x [H,3H] MXU op (bf16 in / f32 acc) ----
    qkv = jnp.dot(x.astype(bf16), wqkv_ref[0], preferred_element_type=f32) + bqkv_ref[0]

    # ---- multi-head self-attention (1/sqrt(dh) pre-folded into Q weights) ----
    ctx_rows = []
    for b in range(batch_tile):
        rows = slice(b * S, (b + 1) * S)
        bias_b = bias_ref[b]                                      # (S, S), pre-broadcast
        heads = []
        for hh in range(num_heads):
            lo = hh * head_dim
            q = qkv[rows, lo:lo + head_dim]
            k = qkv[rows, H + lo:H + lo + head_dim]
            v = qkv[rows, 2 * H + lo:2 * H + lo + head_dim]
            s = jax.lax.dot_general(
                q.astype(bf16), k.astype(bf16), (((1,), (1,)), ((), ())),
                preferred_element_type=f32) + bias_b
            m = jnp.max(s, axis=-1, keepdims=True)
            p = jnp.exp(s - m)
            p = p * pl.reciprocal(jnp.sum(p, axis=-1, keepdims=True), approx=True)
            heads.append(jnp.dot(p.astype(bf16), v.astype(bf16),
                                 preferred_element_type=f32))
        ctx_rows.append(jnp.concatenate(heads, axis=-1))          # (S, H) lane-dense
    ctx = jnp.concatenate(ctx_rows, axis=0)                       # (M, H)

    # single full-K=128 output projection for the whole batch tile
    attn = jnp.dot(ctx.astype(bf16), wo_ref[0], preferred_element_type=f32) + vecs[0:1]

    # ---- add & LayerNorm 1 ----
    h1 = _ln(attn + x, vecs[1:2], vecs[2:3])

    # ---- FFN with in-kernel exact (erf) GELU ----
    inter = jnp.dot(h1.astype(bf16), w1_ref[0], preferred_element_type=f32) + b1_ref[0]
    inter = _gelu_exact(inter)
    ffn = jnp.dot(inter.astype(bf16), w2_ref[0], preferred_element_type=f32) + vecs[3:4]

    # ---- add & LayerNorm 2, carry activations to the next layer step ----
    h2 = _ln(ffn + h1, vecs[4:5], vecs[5:6])
    h_sc[...] = h2

    # ---- last layer: fused pooler + act/slot/value heads (lane-dense logits) ----
    @pl.when(l == pl.num_programs(1) - 1)
    def _():
        cls = jnp.concatenate([h2[b * S:b * S + 1, :] for b in range(batch_tile)],
                              axis=0)                             # (batch_tile, H)
        pooled = jnp.tanh(
            jnp.dot(cls.astype(bf16), pool_w_ref[...], preferred_element_type=f32)
            + pool_b_ref[...])
        logits = jnp.dot(pooled.astype(bf16), heads_w_ref[...],
                         preferred_element_type=f32) + heads_b_ref[...]
        out_ref[...] = logits.astype(out_ref.dtype)


# ----------------------------------------------------------------------------
# Model (synthetic small-BERT + act/slot/value heads)
# ----------------------------------------------------------------------------

CONFIG = dict(
    vocab_size=100,
    max_position=32,
    type_vocab_size=2,
    hidden=128,
    num_layers=2,
    num_heads=2,
    intermediate=256,
    num_acts=5,
    num_slots=7,
    num_values=11,
)


def init_params(key, cfg):
    """Deterministic synthetic init (~N(0, 0.02) like BERT), weights stored [in, out]."""
    std = 0.02
    keys = iter(jax.random.split(key, 256))

    def dense(din, dout):
        w = jax.random.normal(next(keys), (din, dout), jnp.float32) * std
        b = jax.random.normal(next(keys), (1, dout), jnp.float32) * std
        return {"w": w, "b": b}

    def ln(d):
        g = 1.0 + jax.random.normal(next(keys), (1, d), jnp.float32) * std
        b = jax.random.normal(next(keys), (1, d), jnp.float32) * std
        return {"g": g, "b": b}

    H, I = cfg["hidden"], cfg["intermediate"]
    params = {
        "word_emb": jax.random.normal(next(keys), (cfg["vocab_size"], H), jnp.float32) * std,
        "pos_emb": jax.random.normal(next(keys), (cfg["max_position"], H), jnp.float32) * std,
        "type_emb": jax.random.normal(next(keys), (cfg["type_vocab_size"], H), jnp.float32) * std,
        "emb_ln": ln(H),
        "layers": [],
        "pooler": dense(H, H),
        "act_head": dense(H, cfg["num_acts"]),
        "slot_head": dense(H, cfg["num_slots"]),
        "value_head": dense(H, cfg["num_values"]),
    }
    for _ in range(cfg["num_layers"]):
        params["layers"].append({
            "q": dense(H, H), "k": dense(H, H), "v": dense(H, H), "o": dense(H, H),
            "ln1": ln(H),
            "ffn1": dense(H, I), "ffn2": dense(I, H),
            "ln2": ln(H),
        })
    return params


def pack_params(p, cfg):
    """Pack torch-layout params into stacked, pipelined kernel weights.

    * Q weights/bias are pre-scaled by 1/sqrt(head_dim) (scale folded at pack time).
    * Per-layer weights are stacked along a leading [L] axis (BlockSpec pipelines them).
    * Small (1,H) per-layer vectors are packed into one (L, 6, H) slab.
    * Classifier heads are concatenated and padded to a lane-dense 128 columns.
    """
    bf16 = jnp.bfloat16
    H = cfg["hidden"]
    dh = H // cfg["num_heads"]
    scale = 1.0 / math.sqrt(dh)

    wqkv, bqkv, wo, w1, b1, w2, vec6 = [], [], [], [], [], [], []
    for l in p["layers"]:
        wq = l["q"]["w"] * scale
        bq = l["q"]["b"] * scale
        wqkv.append(jnp.concatenate([wq, l["k"]["w"], l["v"]["w"]], axis=1).astype(bf16))
        bqkv.append(jnp.concatenate([bq, l["k"]["b"], l["v"]["b"]], axis=1))
        wo.append(l["o"]["w"].astype(bf16))
        w1.append(l["ffn1"]["w"].astype(bf16))
        b1.append(l["ffn1"]["b"])
        w2.append(l["ffn2"]["w"].astype(bf16))
        vec6.append(jnp.concatenate(
            [l["o"]["b"], l["ln1"]["g"], l["ln1"]["b"],
             l["ffn2"]["b"], l["ln2"]["g"], l["ln2"]["b"]], axis=0))  # (6, H)

    na, ns, nv = cfg["num_acts"], cfg["num_slots"], cfg["num_values"]
    total = na + ns + nv
    pad = (-total) % 128  # lane-dense padded logit slab -> unmasked stores
    wh = jnp.concatenate(
        [p["act_head"]["w"], p["slot_head"]["w"], p["value_head"]["w"]], axis=1)
    bh = jnp.concatenate(
        [p["act_head"]["b"], p["slot_head"]["b"], p["value_head"]["b"]], axis=1)
    wh = jnp.pad(wh, ((0, 0), (0, pad)))
    bh = jnp.pad(bh, ((0, 0), (0, pad)))

    return {
        "word_emb": p["word_emb"], "pos_emb": p["pos_emb"], "type_emb": p["type_emb"],
        "emb_ln": jnp.concatenate([p["emb_ln"]["g"], p["emb_ln"]["b"]], axis=0),  # (2,H)
        "wqkv": jnp.stack(wqkv), "bqkv": jnp.stack(bqkv),
        "wo": jnp.stack(wo),
        "w1": jnp.stack(w1), "b1": jnp.stack(b1), "w2": jnp.stack(w2),
        "vec6": jnp.stack(vec6),
        "pool_w": p["pooler"]["w"].astype(bf16), "pool_b": p["pooler"]["b"],
        "heads_w": wh.astype(bf16), "heads_b": bh,
    }


def dialogue_act_slot_value_forward(packed, input_ids, attention_mask, cfg,
                                    batch_tile=None):
    B, S = input_ids.shape
    H, I = cfg["hidden"], cfg["intermediate"]
    L = cfg["num_layers"]
    na, ns, nv = cfg["num_acts"], cfg["num_slots"], cfg["num_values"]
    P = packed["heads_w"].shape[1]

    if batch_tile is None:
        batch_tile = B        # fold batch into matmul M dim; use B // 2 on v7x (2 TCs)
    assert B % batch_tile == 0
    nb = B // batch_tile

    # ---- embeddings: gather is XLA glue; add + LayerNorm run inside the kernel ----
    # TODO(synk): token_type_ids are assumed all-zero (as in the torch forward call).
    word = jnp.take(packed["word_emb"], input_ids, axis=0).reshape(B * S, H)  # (B*S, H)
    pos_tok = packed["pos_emb"][:S] + packed["type_emb"][0:1]                 # (S, H)

    # extended attention mask, pre-broadcast over query positions (B, S, S)
    bias_row = (1.0 - attention_mask.astype(jnp.float32)) * -10000.0
    bias = jnp.broadcast_to(bias_row[:, None, :], (B, S, S))

    kernel = functools.partial(
        _fused_forward_kernel,
        batch_tile=batch_tile, seq=S,
        num_heads=cfg["num_heads"], head_dim=H // cfg["num_heads"])

    wmap3 = lambda bt, l: (l, 0, 0)      # per-layer stacked weights (pipelined over l)
    cmap2 = lambda bt, l: (0, 0)         # constants, DMA'd once (block index fixed)

    logits = pl.pallas_call(
        kernel,
        out_shape=jax.ShapeDtypeStruct((B, P), jnp.float32),
        grid=(nb, L),
        in_specs=[
            pl.BlockSpec((batch_tile * S, H), lambda bt, l: (bt, 0)),      # word emb
            pl.BlockSpec((S, H), cmap2),                                   # pos + type
            pl.BlockSpec((batch_tile, S, S), lambda bt, l: (bt, 0, 0)),    # attn bias
            pl.BlockSpec((1, H, 3 * H), wmap3),                            # wqkv
            pl.BlockSpec((1, 1, 3 * H), wmap3),                            # bqkv
            pl.BlockSpec((1, H, H), wmap3),                                # wo
            pl.BlockSpec((1, H, I), wmap3),                                # w1
            pl.BlockSpec((1, 1, I), wmap3),                                # b1
            pl.BlockSpec((1, I, H), wmap3),                                # w2
            pl.BlockSpec((1, 6, H), wmap3),                                # packed vecs
            pl.BlockSpec((2, H), cmap2),                                   # emb LN g/b
            pl.BlockSpec((H, H), cmap2),                                   # pooler W
            pl.BlockSpec((1, H), cmap2),                                   # pooler b
            pl.BlockSpec((H, P), cmap2),                                   # heads W
            pl.BlockSpec((1, P), cmap2),                                   # heads b
        ],
        out_specs=pl.BlockSpec((batch_tile, P), lambda bt, l: (bt, 0)),
        scratch_shapes=[pltpu.VMEM((batch_tile * S, H), jnp.float32)],
        compiler_params=pltpu.CompilerParams(
            dimension_semantics=("parallel", "arbitrary"),
            # actual residency here is < 2 MB; explicit limit per perf review,
            # re-derive together with S-tiling before scaling to BERT-base shapes.
            vmem_limit_bytes=32 * 1024 * 1024),
    )(word, pos_tok, bias,
      packed["wqkv"], packed["bqkv"], packed["wo"], packed["w1"], packed["b1"],
      packed["w2"], packed["vec6"], packed["emb_ln"],
      packed["pool_w"], packed["pool_b"], packed["heads_w"], packed["heads_b"])

    act_logits = logits[:, :na]
    slot_logits = logits[:, na:na + ns]
    value_logits = logits[:, na + ns:na + ns + nv]
    return act_logits, slot_logits, value_logits


# ----------------------------------------------------------------------------
# Pure-JAX reference (f32, torch-equivalent math) for a correctness sanity check
# ----------------------------------------------------------------------------

def reference_forward(params, input_ids, attention_mask, cfg):
    B, S = input_ids.shape
    H, nh = cfg["hidden"], cfg["num_heads"]
    dh = H // nh

    def ln(x, g, b, eps=_LN_EPS):
        mu = x.mean(-1, keepdims=True)
        var = ((x - mu) ** 2).mean(-1, keepdims=True)
        return (x - mu) * jax.lax.rsqrt(var + eps) * g + b

    word = jnp.take(params["word_emb"], input_ids, axis=0)
    pos = params["pos_emb"][:S][None]
    tok = params["type_emb"][0][None, None]
    h = ln(word + pos + tok, params["emb_ln"]["g"], params["emb_ln"]["b"])
    bias = ((1.0 - attention_mask.astype(jnp.float32)) * -10000.0)[:, None, None, :]

    for l in params["layers"]:
        x = h.reshape(B * S, H)
        q = (x @ l["q"]["w"] + l["q"]["b"]).reshape(B, S, nh, dh).transpose(0, 2, 1, 3)
        k = (x @ l["k"]["w"] + l["k"]["b"]).reshape(B, S, nh, dh).transpose(0, 2, 1, 3)
        v = (x @ l["v"]["w"] + l["v"]["b"]).reshape(B, S, nh, dh).transpose(0, 2, 1, 3)
        s = jnp.einsum("bhqd,bhkd->bhqk", q, k) / math.sqrt(dh) + bias
        p = jax.nn.softmax(s, axis=-1)
        ctx = jnp.einsum("bhqk,bhkd->bhqd", p, v).transpose(0, 2, 1, 3).reshape(B * S, H)
        attn = ctx @ l["o"]["w"] + l["o"]["b"]
        h1 = ln(attn + x, l["ln1"]["g"], l["ln1"]["b"])
        inter = jax.nn.gelu(h1 @ l["ffn1"]["w"] + l["ffn1"]["b"], approximate=False)
        ffn = inter @ l["ffn2"]["w"] + l["ffn2"]["b"]
        h = ln(ffn + h1, l["ln2"]["g"], l["ln2"]["b"]).reshape(B, S, H)

    cls = h[:, 0, :]
    pooled = jnp.tanh(cls @ params["pooler"]["w"] + params["pooler"]["b"])
    act = pooled @ params["act_head"]["w"] + params["act_head"]["b"]
    slot = pooled @ params["slot_head"]["w"] + params["slot_head"]["b"]
    val = pooled @ params["value_head"]["w"] + params["value_head"]["b"]
    return act, slot, val


if __name__ == "__main__":
    cfg = CONFIG
    key = jax.random.PRNGKey(0)
    k_params, k_ids = jax.random.split(key)

    params = init_params(k_params, cfg)
    packed = pack_params(params, cfg)

    B, S = 2, 8
    input_ids = jax.random.randint(k_ids, (B, S), 0, cfg["vocab_size"], dtype=jnp.int32)
    attention_mask = jnp.array(
        [[1, 1, 1, 1, 1, 1, 1, 1],
         [1, 1, 1, 1, 1, 0, 0, 0]], dtype=jnp.int32)

    fwd = jax.jit(functools.partial(dialogue_act_slot_value_forward, cfg=cfg))
    act_logits, slot_logits, value_logits = fwd(packed, input_ids, attention_mask)
    jax.block_until_ready((act_logits, slot_logits, value_logits))

    assert act_logits.shape == (B, cfg["num_acts"])
    assert slot_logits.shape == (B, cfg["num_slots"])
    assert value_logits.shape == (B, cfg["num_values"])

    # sanity check against full-f32 reference (bf16 matmul weights -> loose tolerance;
    # pl.reciprocal(approx=True) in softmax is a documented, inference-only deviation)
    ref = reference_forward(params, input_ids, attention_mask, cfg)
    for got, want in zip((act_logits, slot_logits, value_logits), ref):
        assert got.shape == want.shape
        assert bool(jnp.all(jnp.isfinite(got)))
        assert float(jnp.max(jnp.abs(got - want))) < 5e-2

    print("KERNEL_OK")
</pallas_src>

<mosaic_0001>
module attributes {stable_mosaic.version = 11 : i64} {
  func.func @_fused_forward_kernel(%arg0: i32, %arg1: i32, %arg2: memref<16x128xf32, #tpu.memory_space<vmem>>, %arg3: memref<8x128xf32, #tpu.memory_space<vmem>>, %arg4: memref<2x8x8xf32, #tpu.memory_space<vmem>>, %arg5: memref<1x128x384xbf16, #tpu.memory_space<vmem>>, %arg6: memref<1x1x384xf32, #tpu.memory_space<vmem>>, %arg7: memref<1x128x128xbf16, #tpu.memory_space<vmem>>, %arg8: memref<1x128x256xbf16, #tpu.memory_space<vmem>>, %arg9: memref<1x1x256xf32, #tpu.memory_space<vmem>>, %arg10: memref<1x256x128xbf16, #tpu.memory_space<vmem>>, %arg11: memref<1x6x128xf32, #tpu.memory_space<vmem>>, %arg12: memref<2x128xf32, #tpu.memory_space<vmem>>, %arg13: memref<128x128xbf16, #tpu.memory_space<vmem>>, %arg14: memref<1x128xf32, #tpu.memory_space<vmem>>, %arg15: memref<128x128xbf16, #tpu.memory_space<vmem>>, %arg16: memref<1x128xf32, #tpu.memory_space<vmem>>, %arg17: memref<2x128xf32, #tpu.memory_space<vmem>>, %arg18: memref<16x128xf32, #tpu.memory_space<vmem>>) attributes {dimension_semantics = [#tpu.dimension_semantics<parallel>, #tpu.dimension_semantics<arbitrary>], iteration_bounds = array<i64: 1, 2>, scalar_prefetch = 0 : i64, scratch_operands = 1 : i64, tpu.core_type = #tpu.core_type<tc>, window_params = [{transform_indices = @transform_0, window_bounds = array<i64: 16, 128>}, {pipeline_mode = #tpu.pipeline_mode<synchronous>, transform_indices = @transform_1, window_bounds = array<i64: 8, 128>}, {transform_indices = @transform_2, window_bounds = array<i64: 2, 8, 8>}, {transform_indices = @transform_3, window_bounds = array<i64: 1, 128, 384>}, {transform_indices = @transform_4, window_bounds = array<i64: 1, 1, 384>}, {transform_indices = @transform_5, window_bounds = array<i64: 1, 128, 128>}, {transform_indices = @transform_6, window_bounds = array<i64: 1, 128, 256>}, {transform_indices = @transform_7, window_bounds = array<i64: 1, 1, 256>}, {transform_indices = @transform_8, window_bounds = array<i64: 1, 256, 128>}, {transform_indices = @transform_9, window_bounds = array<i64: 1, 6, 128>}, {pipeline_mode = #tpu.pipeline_mode<synchronous>, transform_indices = @transform_10, window_bounds = array<i64: 2, 128>}, {pipeline_mode = #tpu.pipeline_mode<synchronous>, transform_indices = @transform_11, window_bounds = array<i64: 128, 128>}, {pipeline_mode = #tpu.pipeline_mode<synchronous>, transform_indices = @transform_12, window_bounds = array<i64: 1, 128>}, {pipeline_mode = #tpu.pipeline_mode<synchronous>, transform_indices = @transform_13, window_bounds = array<i64: 128, 128>}, {pipeline_mode = #tpu.pipeline_mode<synchronous>, transform_indices = @transform_14, window_bounds = array<i64: 1, 128>}, {transform_indices = @transform_15, window_bounds = array<i64: 2, 128>}]} {
    %c0_i32 = arith.constant 0 : i32
    %0 = arith.cmpi eq, %arg1, %c0_i32 : i32
    %1 = arith.extui %0 : i1 to i32
    %c0_i32_0 = arith.constant 0 : i32
    %2 = arith.cmpi ne, %1, %c0_i32_0 : i32
    scf.if %2 {
      %c0_75 = arith.constant 0 : index
      %c0_76 = arith.constant 0 : index
      %217 = vector.load %arg3[%c0_75, %c0_76] : memref<8x128xf32, #tpu.memory_space<vmem>>, vector<8x128xf32>
      %218 = tpu.concatenate %217, %217 in 0 : vector<8x128xf32>, vector<8x128xf32> -> vector<16x128xf32>
      %c0_77 = arith.constant 0 : index
      %c0_78 = arith.constant 0 : index
      %219 = vector.load %arg2[%c0_77, %c0_78] : memref<16x128xf32, #tpu.memory_space<vmem>>, vector<16x128xf32>
      %220 = arith.addf %219, %218 : vector<16x128xf32>
      %c0_79 = arith.constant 0 : index
      %c0_80 = arith.constant 0 : index
      %221 = vector.load %arg12[%c0_79, %c0_80] : memref<2x128xf32, #tpu.memory_space<vmem>>, vector<1x128xf32>
      %c1_81 = arith.constant 1 : index
      %c0_82 = arith.constant 0 : index
      %222 = vector.load %arg12[%c1_81, %c0_82] : memref<2x128xf32, #tpu.memory_space<vmem>>, vector<1x128xf32>
      %cst_83 = arith.constant dense<0.000000e+00> : vector<16xf32>
      %223 = vector.multi_reduction <add>, %220, %cst_83 [1] : vector<16x128xf32> to vector<16xf32>
      %224 = vector.shape_cast %223 : vector<16xf32> to vector<16x1xf32>
      %cst_84 = arith.constant 1.280000e+02 : f32
      %225 = vector.broadcast %cst_84 : f32 to vector<16x1xf32>
      %226 = arith.divf %224, %225 : vector<16x1xf32>
      %227 = vector.broadcast %226 : vector<16x1xf32> to vector<16x128xf32>
      %228 = arith.subf %220, %227 : vector<16x128xf32>
      %229 = arith.mulf %228, %228 : vector<16x128xf32>
      %cst_85 = arith.constant dense<0.000000e+00> : vector<16xf32>
      %230 = vector.multi_reduction <add>, %229, %cst_85 [1] : vector<16x128xf32> to vector<16xf32>
      %231 = vector.shape_cast %230 : vector<16xf32> to vector<16x1xf32>
      %cst_86 = arith.constant 1.280000e+02 : f32
      %232 = vector.broadcast %cst_86 : f32 to vector<16x1xf32>
      %233 = arith.divf %231, %232 : vector<16x1xf32>
      %234 = vector.broadcast %226 : vector<16x1xf32> to vector<16x128xf32>
      %235 = arith.subf %220, %234 : vector<16x128xf32>
      %cst_87 = arith.constant 9.99999996E-13 : f32
      %236 = vector.broadcast %cst_87 : f32 to vector<16x1xf32>
      %237 = arith.addf %233, %236 : vector<16x1xf32>
      %238 = math.rsqrt %237 : vector<16x1xf32>
      %239 = vector.broadcast %238 : vector<16x1xf32> to vector<16x128xf32>
      %240 = arith.mulf %235, %239 : vector<16x128xf32>
      %241 = vector.broadcast %221 : vector<1x128xf32> to vector<16x128xf32>
      %242 = arith.mulf %240, %241 : vector<16x128xf32>
      %243 = vector.broadcast %222 : vector<1x128xf32> to vector<16x128xf32>
      %244 = arith.addf %242, %243 : vector<16x128xf32>
      %c0_88 = arith.constant 0 : index
      %c0_89 = arith.constant 0 : index
      %245 = vector.load %arg18[%c0_88, %c0_89] : memref<16x128xf32, #tpu.memory_space<vmem>>, vector<16x128xf32>
      tpu.vector_store %arg18[%c0_88, %c0_89], %244 {strides = array<i32>} : memref<16x128xf32, #tpu.memory_space<vmem>>, vector<16x128xf32>,
    } else {
    }
    %c0 = arith.constant 0 : index
    %c0_1 = arith.constant 0 : index
    %3 = vector.load %arg18[%c0, %c0_1] : memref<16x128xf32, #tpu.memory_space<vmem>>, vector<16x128xf32>
    %c0_2 = arith.constant 0 : index
    %c0_3 = arith.constant 0 : index
    %c0_4 = arith.constant 0 : index
    %4 = vector.load %arg11[%c0_2, %c0_3, %c0_4] : memref<1x6x128xf32, #tpu.memory_space<vmem>>, vector<1x6x128xf32>
    %5 = vector.shape_cast %4 : vector<1x6x128xf32> to vector<6x128xf32>
    %6 = arith.truncf %3 : vector<16x128xf32> to vector<16x128xbf16>
    %c0_5 = arith.constant 0 : index
    %c0_6 = arith.constant 0 : index
    %c0_7 = arith.constant 0 : index
    %7 = vector.load %arg5[%c0_5, %c0_6, %c0_7] : memref<1x128x384xbf16, #tpu.memory_space<vmem>>, vector<1x128x384xbf16>
    %8 = vector.shape_cast %7 : vector<1x128x384xbf16> to vector<128x384xbf16>
    %cst = arith.constant dense<0.000000e+00> : vector<16x384xf32>
    %9 = tpu.matmul %6, %8, %cst {dimension_numbers = #tpu.dot_dimension_numbers<[1], [0], [0], [1], [0, 0, 1, 1], [], []>} : vector<16x128xbf16>, vector<128x384xbf16>, vector<16x384xf32> -> vector<16x384xf32>
    %c0_8 = arith.constant 0 : index
    %c0_9 = arith.constant 0 : index
    %c0_10 = arith.constant 0 : index
    %10 = vector.load %arg6[%c0_8, %c0_9, %c0_10] : memref<1x1x384xf32, #tpu.memory_space<vmem>>, vector<1x1x384xf32>
    %11 = vector.shape_cast %10 : vector<1x1x384xf32> to vector<1x384xf32>
    %12 = vector.broadcast %11 : vector<1x384xf32> to vector<16x384xf32>
    %13 = arith.addf %9, %12 : vector<16x384xf32>
    %c0_11 = arith.constant 0 : index
    %c0_12 = arith.constant 0 : index
    %c0_13 = arith.constant 0 : index
    %14 = vector.load %arg4[%c0_11, %c0_12, %c0_13] : memref<2x8x8xf32, #tpu.memory_space<vmem>>, vector<1x8x8xf32>
    %15 = vector.shape_cast %14 : vector<1x8x8xf32> to vector<8x8xf32>
    %16 = vector.extract_strided_slice %13 {offsets = [0, 0], sizes = [8, 64], strides = [1, 1]} : vector<16x384xf32> to vector<8x64xf32>
    %17 = vector.extract_strided_slice %13 {offsets = [0, 128], sizes = [8, 64], strides = [1, 1]} : vector<16x384xf32> to vector<8x64xf32>
    %18 = vector.extract_strided_slice %13 {offsets = [0, 256], sizes = [8, 64], strides = [1, 1]} : vector<16x384xf32> to vector<8x64xf32>
    %19 = arith.truncf %16 : vector<8x64xf32> to vector<8x64xbf16>
    %20 = arith.truncf %17 : vector<8x64xf32> to vector<8x64xbf16>
    %cst_14 = arith.constant dense<0.000000e+00> : vector<8x8xf32>
    %21 = tpu.matmul %19, %20, %cst_14 {dimension_numbers = #tpu.dot_dimension_numbers<[1], [1], [0], [0], [0, 0, 1, 0], [], []>} : vector<8x64xbf16>, vector<8x64xbf16>, vector<8x8xf32> -> vector<8x8xf32>
    %22 = arith.addf %21, %15 : vector<8x8xf32>
    %cst_15 = arith.constant dense<0xFF800000> : vector<8xf32>
    %23 = vector.multi_reduction <maximumf>, %22, %cst_15 [1] : vector<8x8xf32> to vector<8xf32>
    %24 = vector.shape_cast %23 : vector<8xf32> to vector<8x1xf32>
    %25 = vector.broadcast %24 : vector<8x1xf32> to vector<8x8xf32>
    %26 = arith.subf %22, %25 : vector<8x8xf32>
    %27 = math.exp %26 : vector<8x8xf32>
    %cst_16 = arith.constant dense<0.000000e+00> : vector<8xf32>
    %28 = vector.multi_reduction <add>, %27, %cst_16 [1] : vector<8x8xf32> to vector<8xf32>
    %29 = vector.shape_cast %28 : vector<8xf32> to vector<8x1xf32>
    %30 = tpu.reciprocal %29 {approx = true} : vector<8x1xf32> -> vector<8x1xf32>
    %31 = vector.broadcast %30 : vector<8x1xf32> to vector<8x8xf32>
    %32 = arith.mulf %27, %31 : vector<8x8xf32>
    %33 = arith.truncf %32 : vector<8x8xf32> to vector<8x8xbf16>
    %34 = arith.truncf %18 : vector<8x64xf32> to vector<8x64xbf16>
    %cst_17 = arith.constant dense<0.000000e+00> : vector<8x64xf32>
    %35 = tpu.matmul %33, %34, %cst_17 {dimension_numbers = #tpu.dot_dimension_numbers<[1], [0], [0], [1], [0, 0, 1, 1], [], []>} : vector<8x8xbf16>, vector<8x64xbf16>, vector<8x64xf32> -> vector<8x64xf32>
    %36 = vector.extract_strided_slice %13 {offsets = [0, 64], sizes = [8, 64], strides = [1, 1]} : vector<16x384xf32> to vector<8x64xf32>
    %37 = vector.extract_strided_slice %13 {offsets = [0, 192], sizes = [8, 64], strides = [1, 1]} : vector<16x384xf32> to vector<8x64xf32>
    %38 = vector.extract_strided_slice %13 {offsets = [0, 320], sizes = [8, 64], strides = [1, 1]} : vector<16x384xf32> to vector<8x64xf32>
    %39 = arith.truncf %36 : vector<8x64xf32> to vector<8x64xbf16>
    %40 = arith.truncf %37 : vector<8x64xf32> to vector<8x64xbf16>
    %cst_18 = arith.constant dense<0.000000e+00> : vector<8x8xf32>
    %41 = tpu.matmul %39, %40, %cst_18 {dimension_numbers = #tpu.dot_dimension_numbers<[1], [1], [0], [0], [0, 0, 1, 0], [], []>} : vector<8x64xbf16>, vector<8x64xbf16>, vector<8x8xf32> -> vector<8x8xf32>
    %42 = arith.addf %41, %15 : vector<8x8xf32>
    %cst_19 = arith.constant dense<0xFF800000> : vector<8xf32>
    %43 = vector.multi_reduction <maximumf>, %42, %cst_19 [1] : vector<8x8xf32> to vector<8xf32>
    %44 = vector.shape_cast %43 : vector<8xf32> to vector<8x1xf32>
    %45 = vector.broadcast %44 : vector<8x1xf32> to vector<8x8xf32>
    %46 = arith.subf %42, %45 : vector<8x8xf32>
    %47 = math.exp %46 : vector<8x8xf32>
    %cst_20 = arith.constant dense<0.000000e+00> : vector<8xf32>
    %48 = vector.multi_reduction <add>, %47, %cst_20 [1] : vector<8x8xf32> to vector<8xf32>
    %49 = vector.shape_cast %48 : vector<8xf32> to vector<8x1xf32>
    %50 = tpu.reciprocal %49 {approx = true} : vector<8x1xf32> -> vector<8x1xf32>
    %51 = vector.broadcast %50 : vector<8x1xf32> to vector<8x8xf32>
    %52 = arith.mulf %47, %51 : vector<8x8xf32>
    %53 = arith.truncf %52 : vector<8x8xf32> to vector<8x8xbf16>
    %54 = arith.truncf %38 : vector<8x64xf32> to vector<8x64xbf16>
    %cst_21 = arith.constant dense<0.000000e+00> : vector<8x64xf32>
    %55 = tpu.matmul %53, %54, %cst_21 {dimension_numbers = #tpu.dot_dimension_numbers<[1], [0], [0], [1], [0, 0, 1, 1], [], []>} : vector<8x8xbf16>, vector<8x64xbf16>, vector<8x64xf32> -> vector<8x64xf32>
    %56 = tpu.concatenate %35, %55 in 1 : vector<8x64xf32>, vector<8x64xf32> -> vector<8x128xf32>
    %c1 = arith.constant 1 : index
    %c0_22 = arith.constant 0 : index
    %c0_23 = arith.constant 0 : index
    %57 = vector.load %arg4[%c1, %c0_22, %c0_23] : memref<2x8x8xf32, #tpu.memory_space<vmem>>, vector<1x8x8xf32>
    %58 = vector.shape_cast %57 : vector<1x8x8xf32> to vector<8x8xf32>
    %59 = vector.extract_strided_slice %13 {offsets = [8, 0], sizes = [8, 64], strides = [1, 1]} : vector<16x384xf32> to vector<8x64xf32>
    %60 = vector.extract_strided_slice %13 {offsets = [8, 128], sizes = [8, 64], strides = [1, 1]} : vector<16x384xf32> to vector<8x64xf32>
    %61 = vector.extract_strided_slice %13 {offsets = [8, 256], sizes = [8, 64], strides = [1, 1]} : vector<16x384xf32> to vector<8x64xf32>
    %62 = arith.truncf %59 : vector<8x64xf32> to vector<8x64xbf16>
    %63 = arith.truncf %60 : vector<8x64xf32> to vector<8x64xbf16>
    %cst_24 = arith.constant dense<0.000000e+00> : vector<8x8xf32>
    %64 = tpu.matmul %62, %63, %cst_24 {dimension_numbers = #tpu.dot_dimension_numbers<[1], [1], [0], [0], [0, 0, 1, 0], [], []>} : vector<8x64xbf16>, vector<8x64xbf16>, vector<8x8xf32> -> vector<8x8xf32>
    %65 = arith.addf %64, %58 : vector<8x8xf32>
    %cst_25 = arith.constant dense<0xFF800000> : vector<8xf32>
    %66 = vector.multi_reduction <maximumf>, %65, %cst_25 [1] : vector<8x8xf32> to vector<8xf32>
    %67 = vector.shape_cast %66 : vector<8xf32> to vector<8x1xf32>
    %68 = vector.broadcast %67 : vector<8x1xf32> to vector<8x8xf32>
    %69 = arith.subf %65, %68 : vector<8x8xf32>
    %70 = math.exp %69 : vector<8x8xf32>
    %cst_26 = arith.constant dense<0.000000e+00> : vector<8xf32>
    %71 = vector.multi_reduction <add>, %70, %cst_26 [1] : vector<8x8xf32> to vector<8xf32>
    %72 = vector.shape_cast %71 : vector<8xf32> to vector<8x1xf32>
    %73 = tpu.reciprocal %72 {approx = true} : vector<8x1xf32> -> vector<8x1xf32>
    %74 = vector.broadcast %73 : vector<8x1xf32> to vector<8x8xf32>
    %75 = arith.mulf %70, %74 : vector<8x8xf32>
    %76 = arith.truncf %75 : vector<8x8xf32> to vector<8x8xbf16>
    %77 = arith.truncf %61 : vector<8x64xf32> to vector<8x64xbf16>
    %cst_27 = arith.constant dense<0.000000e+00> : vector<8x64xf32>
    %78 = tpu.matmul %76, %77, %cst_27 {dimension_numbers = #tpu.dot_dimension_numbers<[1], [0], [0], [1], [0, 0, 1, 1], [], []>} : vector<8x8xbf16>, vector<8x64xbf16>, vector<8x64xf32> -> vector<8x64xf32>
    %79 = vector.extract_strided_slice %13 {offsets = [8, 64], sizes = [8, 64], strides = [1, 1]} : vector<16x384xf32> to vector<8x64xf32>
    %80 = vector.extract_strided_slice %13 {offsets = [8, 192], sizes = [8, 64], strides = [1, 1]} : vector<16x384xf32> to vector<8x64xf32>
    %81 = vector.extract_strided_slice %13 {offsets = [8, 320], sizes = [8, 64], strides = [1, 1]} : vector<16x384xf32> to vector<8x64xf32>
    %82 = arith.truncf %79 : vector<8x64xf32> to vector<8x64xbf16>
    %83 = arith.truncf %80 : vector<8x64xf32> to vector<8x64xbf16>
    %cst_28 = arith.constant dense<0.000000e+00> : vector<8x8xf32>
    %84 = tpu.matmul %82, %83, %cst_28 {dimension_numbers = #tpu.dot_dimension_numbers<[1], [1], [0], [0], [0, 0, 1, 0], [], []>} : vector<8x64xbf16>, vector<8x64xbf16>, vector<8x8xf32> -> vector<8x8xf32>
    %85 = arith.addf %84, %58 : vector<8x8xf32>
    %cst_29 = arith.constant dense<0xFF800000> : vector<8xf32>
    %86 = vector.multi_reduction <maximumf>, %85, %cst_29 [1] : vector<8x8xf32> to vector<8xf32>
    %87 = vector.shape_cast %86 : vector<8xf32> to vector<8x1xf32>
    %88 = vector.broadcast %87 : vector<8x1xf32> to vector<8x8xf32>
    %89 = arith.subf %85, %88 : vector<8x8xf32>
    %90 = math.exp %89 : vector<8x8xf32>
    %cst_30 = arith.constant dense<0.000000e+00> : vector<8xf32>
    %91 = vector.multi_reduction <add>, %90, %cst_30 [1] : vector<8x8xf32> to vector<8xf32>
    %92 = vector.shape_cast %91 : vector<8xf32> to vector<8x1xf32>
    %93 = tpu.reciprocal %92 {approx = true} : vector<8x1xf32> -> vector<8x1xf32>
    %94 = vector.broadcast %93 : vector<8x1xf32> to vector<8x8xf32>
    %95 = arith.mulf %90, %94 : vector<8x8xf32>
    %96 = arith.truncf %95 : vector<8x8xf32> to vector<8x8xbf16>
    %97 = arith.truncf %81 : vector<8x64xf32> to vector<8x64xbf16>
    %cst_31 = arith.constant dense<0.000000e+00> : vector<8x64xf32>
    %98 = tpu.matmul %96, %97, %cst_31 {dimension_numbers = #tpu.dot_dimension_numbers<[1], [0], [0], [1], [0, 0, 1, 1], [], []>} : vector<8x8xbf16>, vector<8x64xbf16>, vector<8x64xf32> -> vector<8x64xf32>
    %99 = tpu.concatenate %78, %98 in 1 : vector<8x64xf32>, vector<8x64xf32> -> vector<8x128xf32>
    %100 = tpu.concatenate %56, %99 in 0 : vector<8x128xf32>, vector<8x128xf32> -> vector<16x128xf32>
    %101 = arith.truncf %100 : vector<16x128xf32> to vector<16x128xbf16>
    %c0_32 = arith.constant 0 : index
    %c0_33 = arith.constant 0 : index
    %c0_34 = arith.constant 0 : index
    %102 = vector.load %arg7[%c0_32, %c0_33, %c0_34] : memref<1x128x128xbf16, #tpu.memory_space<vmem>>, vector<1x128x128xbf16>
    %103 = vector.shape_cast %102 : vector<1x128x128xbf16> to vector<128x128xbf16>
    %cst_35 = arith.constant dense<0.000000e+00> : vector<16x128xf32>
    %104 = tpu.matmul %101, %103, %cst_35 {dimension_numbers = #tpu.dot_dimension_numbers<[1], [0], [0], [1], [0, 0, 1, 1], [], []>} : vector<16x128xbf16>, vector<128x128xbf16>, vector<16x128xf32> -> vector<16x128xf32>
    %105 = vector.extract_strided_slice %5 {offsets = [0, 0], sizes = [1, 128], strides = [1, 1]} : vector<6x128xf32> to vector<1x128xf32>
    %106 = vector.broadcast %105 : vector<1x128xf32> to vector<16x128xf32>
    %107 = arith.addf %104, %106 : vector<16x128xf32>
    %108 = arith.addf %107, %3 : vector<16x128xf32>
    %109 = vector.extract_strided_slice %5 {offsets = [1, 0], sizes = [1, 128], strides = [1, 1]} : vector<6x128xf32> to vector<1x128xf32>
    %110 = vector.extract_strided_slice %5 {offsets = [2, 0], sizes = [1, 128], strides = [1, 1]} : vector<6x128xf32> to vector<1x128xf32>
    %cst_36 = arith.constant dense<0.000000e+00> : vector<16xf32>
    %111 = vector.multi_reduction <add>, %108, %cst_36 [1] : vector<16x128xf32> to vector<16xf32>
    %112 = vector.shape_cast %111 : vector<16xf32> to vector<16x1xf32>
    %cst_37 = arith.constant 1.280000e+02 : f32
    %113 = vector.broadcast %cst_37 : f32 to vector<16x1xf32>
    %114 = arith.divf %112, %113 : vector<16x1xf32>
    %115 = vector.broadcast %114 : vector<16x1xf32> to vector<16x128xf32>
    %116 = arith.subf %108, %115 : vector<16x128xf32>
    %117 = arith.mulf %116, %116 : vector<16x128xf32>
    %cst_38 = arith.constant dense<0.000000e+00> : vector<16xf32>
    %118 = vector.multi_reduction <add>, %117, %cst_38 [1] : vector<16x128xf32> to vector<16xf32>
    %119 = vector.shape_cast %118 : vector<16xf32> to vector<16x1xf32>
    %cst_39 = arith.constant 1.280000e+02 : f32
    %120 = vector.broadcast %cst_39 : f32 to vector<16x1xf32>
    %121 = arith.divf %119, %120 : vector<16x1xf32>
    %122 = vector.broadcast %114 : vector<16x1xf32> to vector<16x128xf32>
    %123 = arith.subf %108, %122 : vector<16x128xf32>
    %cst_40 = arith.constant 9.99999996E-13 : f32
    %124 = vector.broadcast %cst_40 : f32 to vector<16x1xf32>
    %125 = arith.addf %121, %124 : vector<16x1xf32>
    %126 = math.rsqrt %125 : vector<16x1xf32>
    %127 = vector.broadcast %126 : vector<16x1xf32> to vector<16x128xf32>
    %128 = arith.mulf %123, %127 : vector<16x128xf32>
    %129 = vector.broadcast %109 : vector<1x128xf32> to vector<16x128xf32>
    %130 = arith.mulf %128, %129 : vector<16x128xf32>
    %131 = vector.broadcast %110 : vector<1x128xf32> to vector<16x128xf32>
    %132 = arith.addf %130, %131 : vector<16x128xf32>
    %133 = arith.truncf %132 : vector<16x128xf32> to vector<16x128xbf16>
    %c0_41 = arith.constant 0 : index
    %c0_42 = arith.constant 0 : index
    %c0_43 = arith.constant 0 : index
    %134 = vector.load %arg8[%c0_41, %c0_42, %c0_43] : memref<1x128x256xbf16, #tpu.memory_space<vmem>>, vector<1x128x256xbf16>
    %135 = vector.shape_cast %134 : vector<1x128x256xbf16> to vector<128x256xbf16>
    %cst_44 = arith.constant dense<0.000000e+00> : vector<16x256xf32>
    %136 = tpu.matmul %133, %135, %cst_44 {dimension_numbers = #tpu.dot_dimension_numbers<[1], [0], [0], [1], [0, 0, 1, 1], [], []>} : vector<16x128xbf16>, vector<128x256xbf16>, vector<16x256xf32> -> vector<16x256xf32>
    %c0_45 = arith.constant 0 : index
    %c0_46 = arith.constant 0 : index
    %c0_47 = arith.constant 0 : index
    %137 = vector.load %arg9[%c0_45, %c0_46, %c0_47] : memref<1x1x256xf32, #tpu.memory_space<vmem>>, vector<1x1x256xf32>
    %138 = vector.shape_cast %137 : vector<1x1x256xf32> to vector<1x256xf32>
    %139 = vector.broadcast %138 : vector<1x256xf32> to vector<16x256xf32>
    %140 = arith.addf %136, %139 : vector<16x256xf32>
    %cst_48 = arith.constant 5.000000e-01 : f32
    %141 = vector.broadcast %cst_48 : f32 to vector<16x256xf32>
    %142 = arith.mulf %141, %140 : vector<16x256xf32>
    %cst_49 = arith.constant 0.707106769 : f32
    %143 = vector.broadcast %cst_49 : f32 to vector<16x256xf32>
    %144 = arith.mulf %140, %143 : vector<16x256xf32>
    %145 = math.absf %144 : vector<16x256xf32>
    %cst_50 = arith.constant 0.327591091 : f32
    %146 = vector.broadcast %cst_50 : f32 to vector<16x256xf32>
    %147 = arith.mulf %146, %145 : vector<16x256xf32>
    %cst_51 = arith.constant 1.000000e+00 : f32
    %148 = vector.broadcast %cst_51 : f32 to vector<16x256xf32>
    %149 = arith.addf %148, %147 : vector<16x256xf32>
    %cst_52 = arith.constant 1.000000e+00 : f32
    %150 = vector.broadcast %cst_52 : f32 to vector<16x256xf32>
    %151 = arith.divf %150, %149 : vector<16x256xf32>
    %cst_53 = arith.constant 1.06140542 : f32
    %152 = vector.broadcast %cst_53 : f32 to vector<16x256xf32>
    %153 = arith.mulf %151, %152 : vector<16x256xf32>
    %cst_54 = arith.constant -1.45315206 : f32
    %154 = vector.broadcast %cst_54 : f32 to vector<16x256xf32>
    %155 = arith.addf %154, %153 : vector<16x256xf32>
    %156 = arith.mulf %151, %155 : vector<16x256xf32>
    %cst_55 = arith.constant 1.42141378 : f32
    %157 = vector.broadcast %cst_55 : f32 to vector<16x256xf32>
    %158 = arith.addf %157, %156 : vector<16x256xf32>
    %159 = arith.mulf %151, %158 : vector<16x256xf32>
    %cst_56 = arith.constant -0.284496725 : f32
    %160 = vector.broadcast %cst_56 : f32 to vector<16x256xf32>
    %161 = arith.addf %160, %159 : vector<16x256xf32>
    %162 = arith.mulf %151, %161 : vector<16x256xf32>
    %cst_57 = arith.constant 0.254829586 : f32
    %163 = vector.broadcast %cst_57 : f32 to vector<16x256xf32>
    %164 = arith.addf %163, %162 : vector<16x256xf32>
    %165 = arith.mulf %151, %164 : vector<16x256xf32>
    %cst_58 = arith.constant 0.000000e+00 : f32
    %166 = vector.broadcast %cst_58 : f32 to vector<16x256xf32>
    %167 = arith.subf %166, %145 : vector<16x256xf32>
    %168 = arith.mulf %167, %145 : vector<16x256xf32>
    %169 = math.exp %168 : vector<16x256xf32>
    %170 = arith.mulf %165, %169 : vector<16x256xf32>
    %cst_59 = arith.constant 1.000000e+00 : f32
    %171 = vector.broadcast %cst_59 : f32 to vector<16x256xf32>
    %172 = arith.subf %171, %170 : vector<16x256xf32>
    %cst_60 = arith.constant 0.000000e+00 : f32
    %173 = vector.broadcast %cst_60 : f32 to vector<16x256xf32>
    %174 = arith.cmpf olt, %144, %173 : vector<16x256xf32>
    %cst_61 = arith.constant 0.000000e+00 : f32
    %175 = vector.broadcast %cst_61 : f32 to vector<16x256xf32>
    %176 = arith.subf %175, %172 : vector<16x256xf32>
    %177 = arith.select %174, %176, %172 : vector<16x256xi1>, vector<16x256xf32>
    %cst_62 = arith.constant 1.000000e+00 : f32
    %178 = vector.broadcast %cst_62 : f32 to vector<16x256xf32>
    %179 = arith.addf %178, %177 : vector<16x256xf32>
    %180 = arith.mulf %142, %179 : vector<16x256xf32>
    %181 = arith.truncf %180 : vector<16x256xf32> to vector<16x256xbf16>
    %c0_63 = arith.constant 0 : index
    %c0_64 = arith.constant 0 : index
    %c0_65 = arith.constant 0 : index
    %182 = vector.load %arg10[%c0_63, %c0_64, %c0_65] : memref<1x256x128xbf16, #tpu.memory_space<vmem>>, vector<1x256x128xbf16>
    %183 = vector.shape_cast %182 : vector<1x256x128xbf16> to vector<256x128xbf16>
    %cst_66 = arith.constant dense<0.000000e+00> : vector<16x128xf32>
    %184 = tpu.matmul %181, %183, %cst_66 {dimension_numbers = #tpu.dot_dimension_numbers<[1], [0], [0], [1], [0, 0, 1, 1], [], []>} : vector<16x256xbf16>, vector<256x128xbf16>, vector<16x128xf32> -> vector<16x128xf32>
    %185 = vector.extract_strided_slice %5 {offsets = [3, 0], sizes = [1, 128], strides = [1, 1]} : vector<6x128xf32> to vector<1x128xf32>
    %186 = vector.broadcast %185 : vector<1x128xf32> to vector<16x128xf32>
    %187 = arith.addf %184, %186 : vector<16x128xf32>
    %188 = arith.addf %187, %132 : vector<16x128xf32>
    %189 = vector.extract_strided_slice %5 {offsets = [4, 0], sizes = [1, 128], strides = [1, 1]} : vector<6x128xf32> to vector<1x128xf32>
    %190 = vector.extract_strided_slice %5 {offsets = [5, 0], sizes = [1, 128], strides = [1, 1]} : vector<6x128xf32> to vector<1x128xf32>
    %cst_67 = arith.constant dense<0.000000e+00> : vector<16xf32>
    %191 = vector.multi_reduction <add>, %188, %cst_67 [1] : vector<16x128xf32> to vector<16xf32>
    %192 = vector.shape_cast %191 : vector<16xf32> to vector<16x1xf32>
    %cst_68 = arith.constant 1.280000e+02 : f32
    %193 = vector.broadcast %cst_68 : f32 to vector<16x1xf32>
    %194 = arith.divf %192, %193 : vector<16x1xf32>
    %195 = vector.broadcast %194 : vector<16x1xf32> to vector<16x128xf32>
    %196 = arith.subf %188, %195 : vector<16x128xf32>
    %197 = arith.mulf %196, %196 : vector<16x128xf32>
    %cst_69 = arith.constant dense<0.000000e+00> : vector<16xf32>
    %198 = vector.multi_reduction <add>, %197, %cst_69 [1] : vector<16x128xf32> to vector<16xf32>
    %199 = vector.shape_cast %198 : vector<16xf32> to vector<16x1xf32>
    %cst_70 = arith.constant 1.280000e+02 : f32
    %200 = vector.broadcast %cst_70 : f32 to vector<16x1xf32>
    %201 = arith.divf %199, %200 : vector<16x1xf32>
    %202 = vector.broadcast %194 : vector<16x1xf32> to vector<16x128xf32>
    %203 = arith.subf %188, %202 : vector<16x128xf32>
    %cst_71 = arith.constant 9.99999996E-13 : f32
    %204 = vector.broadcast %cst_71 : f32 to vector<16x1xf32>
    %205 = arith.addf %201, %204 : vector<16x1xf32>
    %206 = math.rsqrt %205 : vector<16x1xf32>
    %207 = vector.broadcast %206 : vector<16x1xf32> to vector<16x128xf32>
    %208 = arith.mulf %203, %207 : vector<16x128xf32>
    %209 = vector.broadcast %189 : vector<1x128xf32> to vector<16x128xf32>
    %210 = arith.mulf %208, %209 : vector<16x128xf32>
    %211 = vector.broadcast %190 : vector<1x128xf32> to vector<16x128xf32>
    %212 = arith.addf %210, %211 : vector<16x128xf32>
    %c0_72 = arith.constant 0 : index
    %c0_73 = arith.constant 0 : index
    %213 = vector.load %arg18[%c0_72, %c0_73] : memref<16x128xf32, #tpu.memory_space<vmem>>, vector<16x128xf32>
    tpu.vector_store %arg18[%c0_72, %c0_73], %212 {strides = array<i32>} : memref<16x128xf32, #tpu.memory_space<vmem>>, vector<16x128xf32>,
    %c1_i32 = arith.constant 1 : i32
    %214 = arith.cmpi eq, %arg1, %c1_i32 : i32
    %215 = arith.extui %214 : i1 to i32
    %c0_i32_74 = arith.constant 0 : i32
    %216 = arith.cmpi ne, %215, %c0_i32_74 : i32
    scf.if %216 {
      %217 = vector.extract_strided_slice %212 {offsets = [0, 0], sizes = [1, 128], strides = [1, 1]} : vector<16x128xf32> to vector<1x128xf32>
      %218 = vector.extract_strided_slice %212 {offsets = [8, 0], sizes = [1, 128], strides = [1, 1]} : vector<16x128xf32> to vector<1x128xf32>
      %219 = tpu.concatenate %217, %218 in 0 : vector<1x128xf32>, vector<1x128xf32> -> vector<2x128xf32>
      %220 = arith.truncf %219 : vector<2x128xf32> to vector<2x128xbf16>
      %c0_75 = arith.constant 0 : index
      %c0_76 = arith.constant 0 : index
      %221 = vector.load %arg13[%c0_75, %c0_76] : memref<128x128xbf16, #tpu.memory_space<vmem>>, vector<128x128xbf16>
      %cst_77 = arith.constant dense<0.000000e+00> : vector<2x128xf32>
      %222 = tpu.matmul %220, %221, %cst_77 {dimension_numbers = #tpu.dot_dimension_numbers<[1], [0], [0], [1], [0, 0, 1, 1], [], []>} : vector<2x128xbf16>, vector<128x128xbf16>, vector<2x128xf32> -> vector<2x128xf32>
      %c0_78 = arith.constant 0 : index
      %c0_79 = arith.constant 0 : index
      %223 = vector.load %arg14[%c0_78, %c0_79] : memref<1x128xf32, #tpu.memory_space<vmem>>, vector<1x128xf32>
      %224 = vector.broadcast %223 : vector<1x128xf32> to vector<2x128xf32>
      %225 = arith.addf %222, %224 : vector<2x128xf32>
      %226 = math.tanh %225 : vector<2x128xf32>
      %227 = arith.truncf %226 : vector<2x128xf32> to vector<2x128xbf16>
      %c0_80 = arith.constant 0 : index
      %c0_81 = arith.constant 0 : index
      %228 = vector.load %arg15[%c0_80, %c0_81] : memref<128x128xbf16, #tpu.memory_space<vmem>>, vector<128x128xbf16>
      %cst_82 = arith.constant dense<0.000000e+00> : vector<2x128xf32>
      %229 = tpu.matmul %227, %228, %cst_82 {dimension_numbers = #tpu.dot_dimension_numbers<[1], [0], [0], [1], [0, 0, 1, 1], [], []>} : vector<2x128xbf16>, vector<128x128xbf16>, vector<2x128xf32> -> vector<2x128xf32>
      %c0_83 = arith.constant 0 : index
      %c0_84 = arith.constant 0 : index
      %230 = vector.load %arg16[%c0_83, %c0_84] : memref<1x128xf32, #tpu.memory_space<vmem>>, vector<1x128xf32>
      %231 = vector.broadcast %230 : vector<1x128xf32> to vector<2x128xf32>
      %232 = arith.addf %229, %231 : vector<2x128xf32>
      %c0_85 = arith.constant 0 : index
      %c0_86 = arith.constant 0 : index
      %233 = vector.load %arg17[%c0_85, %c0_86] : memref<2x128xf32, #tpu.memory_space<vmem>>, vector<2x128xf32>
      tpu.vector_store %arg17[%c0_85, %c0_86], %232 {strides = array<i32>} : memref<2x128xf32, #tpu.memory_space<vmem>>, vector<2x128xf32>,
    } else {
    }
    return
  }
  func.func @transform_0(%arg0: i32, %arg1: i32) -> (i32, i32) {
    %c0_i32 = arith.constant 0 : i32
    %c0_i32_0 = arith.constant 0 : i32
    return %arg0, %c0_i32 : i32, i32
  }
  func.func @transform_1(%arg0: i32, %arg1: i32) -> (i32, i32) {
    %c0_i32 = arith.constant 0 : i32
    %c0_i32_0 = arith.constant 0 : i32
    %c0_i32_1 = arith.constant 0 : i32
    return %c0_i32, %c0_i32_0 : i32, i32
  }
  func.func @transform_2(%arg0: i32, %arg1: i32) -> (i32, i32, i32) {
    %c0_i32 = arith.constant 0 : i32
    %c0_i32_0 = arith.constant 0 : i32
    %c0_i32_1 = arith.constant 0 : i32
    return %arg0, %c0_i32, %c0_i32_0 : i32, i32, i32
  }
  func.func @transform_3(%arg0: i32, %arg1: i32) -> (i32, i32, i32) {
    %c0_i32 = arith.constant 0 : i32
    %c0_i32_0 = arith.constant 0 : i32
    %c0_i32_1 = arith.constant 0 : i32
    return %arg1, %c0_i32, %c0_i32_0 : i32, i32, i32
  }
  func.func @transform_4(%arg0: i32, %arg1: i32) -> (i32, i32, i32) {
    %c0_i32 = arith.constant 0 : i32
    %c0_i32_0 = arith.constant 0 : i32
    %c0_i32_1 = arith.constant 0 : i32
    return %arg1, %c0_i32, %c0_i32_0 : i32, i32, i32
  }
  func.func @transform_5(%arg0: i32, %arg1: i32) -> (i32, i32, i32) {
    %c0_i32 = arith.constant 0 : i32
    %c0_i32_0 = arith.constant 0 : i32
    %c0_i32_1 = arith.constant 0 : i32
    return %arg1, %c0_i32, %c0_i32_0 : i32, i32, i32
  }
  func.func @transform_6(%arg0: i32, %arg1: i32) -> (i32, i32, i32) {
    %c0_i32 = arith.constant 0 : i32
    %c0_i32_0 = arith.constant 0 : i32
    %c0_i32_1 = arith.constant 0 : i32
    return %arg1, %c0_i32, %c0_i32_0 : i32, i32, i32
  }
  func.func @transform_7(%arg0: i32, %arg1: i32) -> (i32, i32, i32) {
    %c0_i32 = arith.constant 0 : i32
    %c0_i32_0 = arith.constant 0 : i32
    %c0_i32_1 = arith.constant 0 : i32
    return %arg1, %c0_i32, %c0_i32_0 : i32, i32, i32
  }
  func.func @transform_8(%arg0: i32, %arg1: i32) -> (i32, i32, i32) {
    %c0_i32 = arith.constant 0 : i32
    %c0_i32_0 = arith.constant 0 : i32
    %c0_i32_1 = arith.constant 0 : i32
    return %arg1, %c0_i32, %c0_i32_0 : i32, i32, i32
  }
  func.func @transform_9(%arg0: i32, %arg1: i32) -> (i32, i32, i32) {
    %c0_i32 = arith.constant 0 : i32
    %c0_i32_0 = arith.constant 0 : i32
    %c0_i32_1 = arith.constant 0 : i32
    return %arg1, %c0_i32, %c0_i32_0 : i32, i32, i32
  }
  func.func @transform_10(%arg0: i32, %arg1: i32) -> (i32, i32) {
    %c0_i32 = arith.constant 0 : i32
    %c0_i32_0 = arith.constant 0 : i32
    %c0_i32_1 = arith.constant 0 : i32
    return %c0_i32, %c0_i32_0 : i32, i32
  }
  func.func @transform_11(%arg0: i32, %arg1: i32) -> (i32, i32) {
    %c0_i32 = arith.constant 0 : i32
    %c0_i32_0 = arith.constant 0 : i32
    %c0_i32_1 = arith.constant 0 : i32
    return %c0_i32, %c0_i32_0 : i32, i32
  }
  func.func @transform_12(%arg0: i32, %arg1: i32) -> (i32, i32) {
    %c0_i32 = arith.constant 0 : i32
    %c0_i32_0 = arith.constant 0 : i32
    %c0_i32_1 = arith.constant 0 : i32
    return %c0_i32, %c0_i32_0 : i32, i32
  }
  func.func @transform_13(%arg0: i32, %arg1: i32) -> (i32, i32) {
    %c0_i32 = arith.constant 0 : i32
    %c0_i32_0 = arith.constant 0 : i32
    %c0_i32_1 = arith.constant 0 : i32
    return %c0_i32, %c0_i32_0 : i32, i32
  }
  func.func @transform_14(%arg0: i32, %arg1: i32) -> (i32, i32) {
    %c0_i32 = arith.constant 0 : i32
    %c0_i32_0 = arith.constant 0 : i32
    %c0_i32_1 = arith.constant 0 : i32
    return %c0_i32, %c0_i32_0 : i32, i32
  }
  func.func @transform_15(%arg0: i32, %arg1: i32) -> (i32, i32) {
    %c0_i32 = arith.constant 0 : i32
    %c0_i32_0 = arith.constant 0 : i32
    return %arg0, %c0_i32 : i32, i32
  }
}

</mosaic_0001>

<llo_original>
// kernel: dialogue_act_slot_value_forward.1
$region0: #{dialogue_act_slot_value_forward.1}
  #allocation0 [shape = 'u32[]', space=smem, size = 0x4, offset = 0x4, fixed_abs, tag = 'smem constant byte address 0x4 - core index']
  #allocation1 [shape = 'u32[72,128]{1,0:T(1,128)}', space=vmem, size = 0x9000, scoped, tag = 'internal scratch']
  #allocation2 [shape = 'f32[16,128]{1,0:T(8,128)}', space=vmem, size = 0x2000, scoped, tag = 'scratch operand']
  %s0 = inlined_call_operand.vmem [shape: f32[16,128], index: 0, kind: input, shape index: {}]
  %s1 = inlined_call_operand.vmem [shape: f32[8,128], index: 1, kind: input, shape index: {}]
  %s2 = inlined_call_operand.vmem [shape: f32[2,8,8], index: 2, kind: input, shape index: {}]
  %s3 = inlined_call_operand.hbm [shape: bf16[2,128,384], index: 3, kind: input, shape index: {}]
  %s4 = inlined_call_operand.vmem [shape: f32[2,1,384], index: 4, kind: input, shape index: {}]
  %s5 = inlined_call_operand.vmem [shape: bf16[2,128,128], index: 5, kind: input, shape index: {}]
  %s6 = inlined_call_operand.hbm [shape: bf16[2,128,256], index: 6, kind: input, shape index: {}]
  %s7 = inlined_call_operand.vmem [shape: f32[2,1,256], index: 7, kind: input, shape index: {}]
  %s8 = inlined_call_operand.hbm [shape: bf16[2,256,128], index: 8, kind: input, shape index: {}]
  %s9 = inlined_call_operand.vmem [shape: f32[2,6,128], index: 9, kind: input, shape index: {}]
  %s10 = inlined_call_operand.vmem [shape: f32[2,128], index: 10, kind: input, shape index: {}]
  %s11 = inlined_call_operand.vmem [shape: bf16[128,128], index: 11, kind: input, shape index: {}]
  %s12 = inlined_call_operand.vmem [shape: f32[1,128], index: 12, kind: input, shape index: {}]
  %s13 = inlined_call_operand.hbm [shape: bf16[128,128], index: 13, kind: input, shape index: {}]
  %s14 = inlined_call_operand.vmem [shape: f32[1,128], index: 14, kind: input, shape index: {}]
  %s15 = inlined_call_operand.vmem [shape: f32[2,128], index: 15, kind: output, shape index: {}]
  %s16 = sld [smem:[#allocation0]]
  $region117: #{dialogue_act_slot_value_forward.1} parent=0
    _
  %s18 = ssub.s32 1, %s16
  %s19 = scalar_select 0, %s18, %s16
  $region1: #{dialogue_act_slot_value_forward.1} parent=0
    #allocation3 [shape = 'u8[196608]{0}', space=vmem, size = 0x30000, scoped, tag = 'input window, operand 3']
    #allocation4 [shape = 's32[2]{0}', space=sflag, size = 0x8, scoped, tag = 'scoped memory for dialogue_act_slot_value_forward.1']
    #allocation5 [shape = 'u8[131072]{0}', space=vmem, size = 0x20000, scoped, tag = 'input window, operand 6']
    #allocation6 [shape = 's32[2]{0}', space=sflag, size = 0x8, scoped, tag = 'scoped memory for dialogue_act_slot_value_forward.1']
    #allocation7 [shape = 'u8[131072]{0}', space=vmem, size = 0x20000, scoped, tag = 'input window, operand 8']
    #allocation8 [shape = 'u8[32768]{0}', space=vmem, size = 0x8000, scoped, tag = 'input window, operand 13, single buffered']
    #allocation9 [shape = 's32[1]{0}', space=sflag, size = 0x4, scoped, tag = 'scoped memory for dialogue_act_slot_value_forward.1']
    %20 = vsyncpa [#allocation4], 0
    %s21 = scalar_lea.sflag [#allocation4], 1
    %22 = vsyncpa %s21, 0
    %23 = vsyncpa [#allocation6], 0
    %s24 = scalar_lea.sflag [#allocation6], 1
    %25 = vsyncpa %s24, 0
    %26 = vsyncpa [#allocation9], 0
    loop: start=0, step=1, limit=4
    $region2: #{dialogue_act_slot_value_forward.1} parent=1 // loop_pre_header
      _
    $region3: #{dialogue_act_slot_value_forward.1} parent=1 // loop_header
      %s28 = sphi 0, %s32
      %p29 = scmp.ge.s32.totalorder %s28, 4
      %s35 = sphi 0, %s47
      %s36 = sphi 0, %s43
      %s37 = sphi 0, %s35
      %s38 = sphi 0, %s36
      %s39 = sphi 0, %s37
      %s40 = sphi 0, %s38
      %s50 = sphi 0, %s52
      %s53 = sphi 0, %s50
      %s54 = sphi 0, %s53
      %s70 = sphi 0, %s54
      %s74 = sphi 0, %s74
      %s76 = sphi 0, %s74
      %s77 = sphi 0, %s76
      %s91 = sphi 0, %s77
      %s97 = sphi 0, %s99
      %s100 = sphi 0, %s97
      %s101 = sphi 0, %s100
      %s117 = sphi 0, %s101
      %s123 = sphi 0, %s125
      %s126 = sphi 0, %s123
      %s127 = sphi 0, %s126
      %s143 = sphi 0, %s127
      %s149 = sphi 0, %s151
      %s152 = sphi 0, %s149
      %s153 = sphi 0, %s152
      %s169 = sphi 0, %s153
      %s175 = sphi 0, %s177
      %s178 = sphi 0, %s175
      %s179 = sphi 0, %s178
      %s195 = sphi 0, %s179
      %s201 = sphi 0, %s203
      %s204 = sphi 0, %s201
      %s205 = sphi 0, %s204
      %s221 = sphi 0, %s205
      %s227 = sphi 0, %s229
      %s230 = sphi 0, %s227
      %s231 = sphi 0, %s230
      %s247 = sphi 0, %s231
      %s253 = sphi 0, %s255
      %s256 = sphi 0, %s253
      %s257 = sphi 0, %s256
      %s273 = sphi 0, %s257
      %s279 = sphi 0, %s281
      %s282 = sphi 0, %s279
      %s283 = sphi 0, %s282
      %s299 = sphi 0, %s283
      %s303 = sphi 0, %s303
      %s305 = sphi 0, %s303
      %s306 = sphi 0, %s305
      %s320 = sphi 0, %s306
      %s324 = sphi 0, %s324
      %s326 = sphi 0, %s324
      %s327 = sphi 0, %s326
      %s341 = sphi 0, %s327
      %s345 = sphi 0, %s345
      %s347 = sphi 0, %s345
      %s348 = sphi 0, %s347
      %s362 = sphi 0, %s348
      %s366 = sphi 0, %s366
      %s368 = sphi 0, %s366
      %s369 = sphi 0, %s368
      %s383 = sphi 0, %s369
      %s387 = sphi 0, %s387
      %s389 = sphi 0, %s387
      %s390 = sphi 0, %s389
      %s404 = sphi 0, %s390
      %s410 = sphi 0, %s412
      %s413 = sphi 0, %s410
      %s414 = sphi 0, %s413
      %s430 = sphi 0, %s414
    $region4: #{dialogue_act_slot_value_forward.1} parent=1 // loop_header_branch
      %31 = sbr.rel (%p29) target = $region8
    $region5: #{dialogue_act_slot_value_forward.1} parent=1 // loop_body
      %s33 = ssub.s32 %s28, 1
      %s34 = ssub.s32 %s28, 2
      %s41 = sadd.s32 1, %s36
      %p42 = scmp.ge.s32.totalorder %s41, 2
      %s43 = scalar_select %p42, 0, %s41
      %s44 = sadd.s32 1, %s35
      %s45 = scalar_select %p42, %s44, %s35
      %p46 = scmp.ge.s32.totalorder %s45, 1
      %s47 = scalar_select %p46, 0, %s45
      %s48 = ssub.s32 %s35, %s47
      %p49 = scmp.eq.s32.totalorder %s48, 0
      %s51 = sadd.s32 %s50, 1
      %s52 = scalar_select %p49, %s50, %s51
      %p55 = pneg %p49
      %p56 = scmp.eq.s32.totalorder %s28, 1
      %p57 = por %p55, %p56
      %p58 = scmp.ne.s32.totalorder %s50, %s53
      %p59 = scmp.eq.s32.totalorder %s28, 0
      %p60 = por %p58, %p59
      %p61 = scmp.ne.s32.totalorder %s50, %s53
      %p62 = scmp.eq.s32.totalorder %s33, 1
      %p63 = por %p61, %p62
      %p64 = scmp.ne.s32.totalorder %s53, %s54
      %p65 = scmp.eq.s32.totalorder %s33, 0
      %p66 = por %p64, %p65
      %p67 = scmp.ne.s32.totalorder %s53, %s54
      %p68 = scmp.eq.s32.totalorder %s34, 1
      %p69 = por %p67, %p68
      %p71 = scmp.ne.s32.totalorder %s54, %s70
      %p72 = scmp.eq.s32.totalorder %s34, 0
      %p73 = por %p71, %p72
      %s75 = sadd.s32 %s74, 1
      %p78 = scmp.eq.s32.totalorder %s28, 1
      %p79 = scmp.ne.s32.totalorder %s74, %s76
      %p80 = scmp.eq.s32.totalorder %s28, 0
      %p81 = por %p79, %p80
      %p82 = scmp.ne.s32.totalorder %s74, %s76
      %p83 = scmp.eq.s32.totalorder %s33, 1
      %p84 = por %p82, %p83
      %p85 = scmp.ne.s32.totalorder %s76, %s77
      %p86 = scmp.eq.s32.totalorder %s33, 0
      %p87 = por %p85, %p86
      %p88 = scmp.ne.s32.totalorder %s76, %s77
      %p89 = scmp.eq.s32.totalorder %s34, 1
      %p90 = por %p88, %p89
      %p92 = scmp.ne.s32.totalorder %s77, %s91
      %p93 = scmp.eq.s32.totalorder %s34, 0
      %p94 = por %p92, %p93
      %s95 = ssub.s32 %s35, %s47
      %p96 = scmp.eq.s32.totalorder %s95, 0
      %s98 = sadd.s32 %s97, 1
      %s99 = scalar_select %p96, %s97, %s98
      %p102 = pneg %p96
      %p103 = scmp.eq.s32.totalorder %s28, 1
      %p104 = por %p102, %p103
      %p105 = scmp.ne.s32.totalorder %s97, %s100
      %p106 = scmp.eq.s32.totalorder %s28, 0
      %p107 = por %p105, %p106
      %p108 = scmp.ne.s32.totalorder %s97, %s100
      %p109 = scmp.eq.s32.totalorder %s33, 1
      %p110 = por %p108, %p109
      %p111 = scmp.ne.s32.totalorder %s100, %s101
      %p112 = scmp.eq.s32.totalorder %s33, 0
      %p113 = por %p111, %p112
      %p114 = scmp.ne.s32.totalorder %s100, %s101
      %p115 = scmp.eq.s32.totalorder %s34, 1
      %p116 = por %p114, %p115
      %p118 = scmp.ne.s32.totalorder %s101, %s117
      %p119 = scmp.eq.s32.totalorder %s34, 0
      %p120 = por %p118, %p119
      %s121 = ssub.s32 %s36, %s43
      %p122 = scmp.eq.s32.totalorder %s121, 0
      %s124 = sadd.s32 %s123, 1
      %s125 = scalar_select %p122, %s123, %s124
      %p128 = pneg %p122
      %p129 = scmp.eq.s32.totalorder %s28, 1
      %p130 = por %p128, %p129
      %p131 = scmp.ne.s32.totalorder %s123, %s126
      %p132 = scmp.eq.s32.totalorder %s28, 0
      %p133 = por %p131, %p132
      %p134 = scmp.ne.s32.totalorder %s123, %s126
      %p135 = scmp.eq.s32.totalorder %s33, 1
      %p136 = por %p134, %p135
      %p137 = scmp.ne.s32.totalorder %s126, %s127
      %p138 = scmp.eq.s32.totalorder %s33, 0
      %p139 = por %p137, %p138
      %p140 = scmp.ne.s32.totalorder %s126, %s127
      %p141 = scmp.eq.s32.totalorder %s34, 1
      %p142 = por %p140, %p141
      %p144 = scmp.ne.s32.totalorder %s127, %s143
      %p145 = scmp.eq.s32.totalorder %s34, 0
      %p146 = por %p144, %p145
      %s147 = ssub.s32 %s36, %s43
      %p148 = scmp.eq.s32.totalorder %s147, 0
      %s150 = sadd.s32 %s149, 1
      %s151 = scalar_select %p148, %s149, %s150
      %p154 = pneg %p148
      %p155 = scmp.eq.s32.totalorder %s28, 1
      %p156 = por %p154, %p155
      %p157 = scmp.ne.s32.totalorder %s149, %s152
      %p158 = scmp.eq.s32.totalorder %s28, 0
      %p159 = por %p157, %p158
      %p160 = scmp.ne.s32.totalorder %s149, %s152
      %p161 = scmp.eq.s32.totalorder %s33, 1
      %p162 = por %p160, %p161
      %p163 = scmp.ne.s32.totalorder %s152, %s153
      %p164 = scmp.eq.s32.totalorder %s33, 0
      %p165 = por %p163, %p164
      %p166 = scmp.ne.s32.totalorder %s152, %s153
      %p167 = scmp.eq.s32.totalorder %s34, 1
      %p168 = por %p166, %p167
      %p170 = scmp.ne.s32.totalorder %s153, %s169
      %p171 = scmp.eq.s32.totalorder %s34, 0
      %p172 = por %p170, %p171
      %s173 = ssub.s32 %s36, %s43
      %p174 = scmp.eq.s32.totalorder %s173, 0
      %s176 = sadd.s32 %s175, 1
      %s177 = scalar_select %p174, %s175, %s176
      %p180 = pneg %p174
      %p181 = scmp.eq.s32.totalorder %s28, 1
      %p182 = por %p180, %p181
      %p183 = scmp.ne.s32.totalorder %s175, %s178
      %p184 = scmp.eq.s32.totalorder %s28, 0
      %p185 = por %p183, %p184
      %p186 = scmp.ne.s32.totalorder %s175, %s178
      %p187 = scmp.eq.s32.totalorder %s33, 1
      %p188 = por %p186, %p187
      %p189 = scmp.ne.s32.totalorder %s178, %s179
      %p190 = scmp.eq.s32.totalorder %s33, 0
      %p191 = por %p189, %p190
      %p192 = scmp.ne.s32.totalorder %s178, %s179
      %p193 = scmp.eq.s32.totalorder %s34, 1
      %p194 = por %p192, %p193
      %p196 = scmp.ne.s32.totalorder %s179, %s195
      %p197 = scmp.eq.s32.totalorder %s34, 0
      %p198 = por %p196, %p197
      %s199 = ssub.s32 %s36, %s43
      %p200 = scmp.eq.s32.totalorder %s199, 0
      %s202 = sadd.s32 %s201, 1
      %s203 = scalar_select %p200, %s201, %s202
      %p206 = pneg %p200
      %p207 = scmp.eq.s32.totalorder %s28, 1
      %p208 = por %p206, %p207
      %p209 = scmp.ne.s32.totalorder %s201, %s204
      %p210 = scmp.eq.s32.totalorder %s28, 0
      %p211 = por %p209, %p210
      %p212 = scmp.ne.s32.totalorder %s201, %s204
      %p213 = scmp.eq.s32.totalorder %s33, 1
      %p214 = por %p212, %p213
      %p215 = scmp.ne.s32.totalorder %s204, %s205
      %p216 = scmp.eq.s32.totalorder %s33, 0
      %p217 = por %p215, %p216
      %p218 = scmp.ne.s32.totalorder %s204, %s205
      %p219 = scmp.eq.s32.totalorder %s34, 1
      %p220 = por %p218, %p219
      %p222 = scmp.ne.s32.totalorder %s205, %s221
      %p223 = scmp.eq.s32.totalorder %s34, 0
      %p224 = por %p222, %p223
      %s225 = ssub.s32 %s36, %s43
      %p226 = scmp.eq.s32.totalorder %s225, 0
      %s228 = sadd.s32 %s227, 1
      %s229 = scalar_select %p226, %s227, %s228
      %p232 = pneg %p226
      %p233 = scmp.eq.s32.totalorder %s28, 1
      %p234 = por %p232, %p233
      %p235 = scmp.ne.s32.totalorder %s227, %s230
      %p236 = scmp.eq.s32.totalorder %s28, 0
      %p237 = por %p235, %p236
      %p238 = scmp.ne.s32.totalorder %s227, %s230
      %p239 = scmp.eq.s32.totalorder %s33, 1
      %p240 = por %p238, %p239
      %p241 = scmp.ne.s32.totalorder %s230, %s231
      %p242 = scmp.eq.s32.totalorder %s33, 0
      %p243 = por %p241, %p242
      %p244 = scmp.ne.s32.totalorder %s230, %s231
      %p245 = scmp.eq.s32.totalorder %s34, 1
      %p246 = por %p244, %p245
      %p248 = scmp.ne.s32.totalorder %s231, %s247
      %p249 = scmp.eq.s32.totalorder %s34, 0
      %p250 = por %p248, %p249
      %s251 = ssub.s32 %s36, %s43
      %p252 = scmp.eq.s32.totalorder %s251, 0
      %s254 = sadd.s32 %s253, 1
      %s255 = scalar_select %p252, %s253, %s254
      %p258 = pneg %p252
      %p259 = scmp.eq.s32.totalorder %s28, 1
      %p260 = por %p258, %p259
      %p261 = scmp.ne.s32.totalorder %s253, %s256
      %p262 = scmp.eq.s32.totalorder %s28, 0
      %p263 = por %p261, %p262
      %p264 = scmp.ne.s32.totalorder %s253, %s256
      %p265 = scmp.eq.s32.totalorder %s33, 1
      %p266 = por %p264, %p265
      %p267 = scmp.ne.s32.totalorder %s256, %s257
      %p268 = scmp.eq.s32.totalorder %s33, 0
      %p269 = por %p267, %p268
      %p270 = scmp.ne.s32.totalorder %s256, %s257
      %p271 = scmp.eq.s32.totalorder %s34, 1
      %p272 = por %p270, %p271
      %p274 = scmp.ne.s32.totalorder %s257, %s273
      %p275 = scmp.eq.s32.totalorder %s34, 0
      %p276 = por %p274, %p275
      %s277 = ssub.s32 %s36, %s43
      %p278 = scmp.eq.s32.totalorder %s277, 0
      %s280 = sadd.s32 %s279, 1
      %s281 = scalar_select %p278, %s279, %s280
      %p284 = pneg %p278
      %p285 = scmp.eq.s32.totalorder %s28, 1
      %p286 = por %p284, %p285
      %p287 = scmp.ne.s32.totalorder %s279, %s282
      %p288 = scmp.eq.s32.totalorder %s28, 0
      %p289 = por %p287, %p288
      %p290 = scmp.ne.s32.totalorder %s279, %s282
      %p291 = scmp.eq.s32.totalorder %s33, 1
      %p292 = por %p290, %p291
      %p293 = scmp.ne.s32.totalorder %s282, %s283
      %p294 = scmp.eq.s32.totalorder %s33, 0
      %p295 = por %p293, %p294
      %p296 = scmp.ne.s32.totalorder %s282, %s283
      %p297 = scmp.eq.s32.totalorder %s34, 1
      %p298 = por %p296, %p297
      %p300 = scmp.ne.s32.totalorder %s283, %s299
      %p301 = scmp.eq.s32.totalorder %s34, 0
      %p302 = por %p300, %p301
      %s304 = sadd.s32 %s303, 1
      %p307 = scmp.eq.s32.totalorder %s28, 1
      %p308 = scmp.ne.s32.totalorder %s303, %s305
      %p309 = scmp.eq.s32.totalorder %s28, 0
      %p310 = por %p308, %p309
      %p311 = scmp.ne.s32.totalorder %s303, %s305
      %p312 = scmp.eq.s32.totalorder %s33, 1
      %p313 = por %p311, %p312
      %p314 = scmp.ne.s32.totalorder %s305, %s306
      %p315 = scmp.eq.s32.totalorder %s33, 0
      %p316 = por %p314, %p315
      %p317 = scmp.ne.s32.totalorder %s305, %s306
      %p318 = scmp.eq.s32.totalorder %s34, 1
      %p319 = por %p317, %p318
      %p321 = scmp.ne.s32.totalorder %s306, %s320
      %p322 = scmp.eq.s32.totalorder %s34, 0
      %p323 = por %p321, %p322
      %s325 = sadd.s32 %s324, 1
      %p328 = scmp.eq.s32.totalorder %s28, 1
      %p329 = scmp.ne.s32.totalorder %s324, %s326
      %p330 = scmp.eq.s32.totalorder %s28, 0
      %p331 = por %p329, %p330
      %p332 = scmp.ne.s32.totalorder %s324, %s326
      %p333 = scmp.eq.s32.totalorder %s33, 1
      %p334 = por %p332, %p333
      %p335 = scmp.ne.s32.totalorder %s326, %s327
      %p336 = scmp.eq.s32.totalorder %s33, 0
      %p337 = por %p335, %p336
      %p338 = scmp.ne.s32.totalorder %s326, %s327
      %p339 = scmp.eq.s32.totalorder %s34, 1
      %p340 = por %p338, %p339
      %p342 = scmp.ne.s32.totalorder %s327, %s341
      %p343 = scmp.eq.s32.totalorder %s34, 0
      %p344 = por %p342, %p343
      %s346 = sadd.s32 %s345, 1
      %p349 = scmp.eq.s32.totalorder %s28, 1
      %p350 = scmp.ne.s32.totalorder %s345, %s347
      %p351 = scmp.eq.s32.totalorder %s28, 0
      %p352 = por %p350, %p351
      %p353 = scmp.ne.s32.totalorder %s345, %s347
      %p354 = scmp.eq.s32.totalorder %s33, 1
      %p355 = por %p353, %p354
      %p356 = scmp.ne.s32.totalorder %s347, %s348
      %p357 = scmp.eq.s32.totalorder %s33, 0
      %p358 = por %p356, %p357
      %p359 = scmp.ne.s32.totalorder %s347, %s348
      %p360 = scmp.eq.s32.totalorder %s34, 1
      %p361 = por %p359, %p360
      %p363 = scmp.ne.s32.totalorder %s348, %s362
      %p364 = scmp.eq.s32.totalorder %s34, 0
      %p365 = por %p363, %p364
      %s367 = sadd.s32 %s366, 1
      %p370 = scmp.eq.s32.totalorder %s28, 1
      %p371 = scmp.ne.s32.totalorder %s366, %s368
      %p372 = scmp.eq.s32.totalorder %s28, 0
      %p373 = por %p371, %p372
      %p374 = scmp.ne.s32.totalorder %s366, %s368
      %p375 = scmp.eq.s32.totalorder %s33, 1
      %p376 = por %p374, %p375
      %p377 = scmp.ne.s32.totalorder %s368, %s369
      %p378 = scmp.eq.s32.totalorder %s33, 0
      %p379 = por %p377, %p378
      %p380 = scmp.ne.s32.totalorder %s368, %s369
      %p381 = scmp.eq.s32.totalorder %s34, 1
      %p382 = por %p380, %p381
      %p384 = scmp.ne.s32.totalorder %s369, %s383
      %p385 = scmp.eq.s32.totalorder %s34, 0
      %p386 = por %p384, %p385
      %s388 = sadd.s32 %s387, 1
      %p391 = scmp.eq.s32.totalorder %s28, 1
      %p392 = scmp.ne.s32.totalorder %s387, %s389
      %p393 = scmp.eq.s32.totalorder %s28, 0
      %p394 = por %p392, %p393
      %p395 = scmp.ne.s32.totalorder %s387, %s389
      %p396 = scmp.eq.s32.totalorder %s33, 1
      %p397 = por %p395, %p396
      %p398 = scmp.ne.s32.totalorder %s389, %s390
      %p399 = scmp.eq.s32.totalorder %s33, 0
      %p400 = por %p398, %p399
      %p401 = scmp.ne.s32.totalorder %s389, %s390
      %p402 = scmp.eq.s32.totalorder %s34, 1
      %p403 = por %p401, %p402
      %p405 = scmp.ne.s32.totalorder %s390, %s404
      %p406 = scmp.eq.s32.totalorder %s34, 0
      %p407 = por %p405, %p406
      %s408 = ssub.s32 %s35, %s47
      %p409 = scmp.eq.s32.totalorder %s408, 0
      %s411 = sadd.s32 %s410, 1
      %s412 = scalar_select %p409, %s410, %s411
      %p415 = pneg %p409
      %p416 = scmp.eq.s32.totalorder %s28, 1
      %p417 = por %p415, %p416
      %p418 = scmp.ne.s32.totalorder %s410, %s413
      %p419 = scmp.eq.s32.totalorder %s28, 0
      %p420 = por %p418, %p419
      %p421 = scmp.ne.s32.totalorder %s410, %s413
      %p422 = scmp.eq.s32.totalorder %s33, 1
      %p423 = por %p421, %p422
      %p424 = scmp.ne.s32.totalorder %s413, %s414
      %p425 = scmp.eq.s32.totalorder %s33, 0
      %p426 = por %p424, %p425
      %p427 = scmp.ne.s32.totalorder %s413, %s414
      %p428 = scmp.eq.s32.totalorder %s34, 1
      %p429 = por %p427, %p428
      %p431 = scmp.ne.s32.totalorder %s414, %s430
      %p432 = scmp.eq.s32.totalorder %s34, 0
      %p433 = por %p431, %p432
      %p434 = scmp.le.s32.totalorder 1, %s28
      %p435 = scmp.lt.s32.totalorder %s28, 3
      %p436 = pnand %p434, %p435
      %p437 = pneg %p436
      // Predicated region
      $region9: #{dialogue_act_slot_value_forward.1} parent=5 // pred_check
        _
      $region10: #{dialogue_act_slot_value_forward.1} parent=5 // pred_check_branch
        %439 = sbr.rel (%p436) target = $region12
      $region11: #{dialogue_act_slot_value_forward.1} parent=5 // pred_region
        %s440 = ssub.s32 %s28, 1
        // Predicated region
        $region13: #{dialogue_act_slot_value_forward.1} parent=11 // pred_check
          %p441 = pneg %p66
        $region14: #{dialogue_act_slot_value_forward.1} parent=11 // pred_check_branch
          %443 = sbr.rel (%p441) target = $region16
        $region15: #{dialogue_act_slot_value_forward.1} parent=11 // pred_region
          %s444 = smul.u32 2, %s37
          %p445 = scmp.lt.s32.totalorder %s444, 1
          %s446 = scalar_select %p445, %s444, 1
          %s447 = smul.addr %s446, 8
          %s448 = scalar_lea.vmem %s0, %s447
          %s449 = smul.u32 2, %s37
        $region16: #{dialogue_act_slot_value_forward.1} parent=11 // pred_fallthru
          _
        // Predicated region
        $region17: #{dialogue_act_slot_value_forward.1} parent=11 // pred_check
          %p450 = pneg %p87
        $region18: #{dialogue_act_slot_value_forward.1} parent=11 // pred_check_branch
          %452 = sbr.rel (%p450) target = $region20
        $region19: #{dialogue_act_slot_value_forward.1} parent=11 // pred_region
          _
        $region20: #{dialogue_act_slot_value_forward.1} parent=11 // pred_fallthru
          _
        // Predicated region
        $region21: #{dialogue_act_slot_value_forward.1} parent=11 // pred_check
          %p453 = pneg %p113
        $region22: #{dialogue_act_slot_value_forward.1} parent=11 // pred_check_branch
          %455 = sbr.rel (%p453) target = $region24
        $region23: #{dialogue_act_slot_value_forward.1} parent=11 // pred_region
          %s456 = smul.u32 2, %s37
          %p457 = scmp.lt.s32.totalorder %s456, 1
          %s458 = scalar_select %p457, %s456, 1
          %s459 = smul.addr %s458, 8
          %s460 = scalar_lea.vmem %s2, %s459
          %s461 = smul.u32 2, %s37
        $region24: #{dialogue_act_slot_value_forward.1} parent=11 // pred_fallthru
          _
        // Predicated region
        $region25: #{dialogue_act_slot_value_forward.1} parent=11 // pred_check
          %p462 = pneg %p316
        $region26: #{dialogue_act_slot_value_forward.1} parent=11 // pred_check_branch
          %464 = sbr.rel (%p462) target = $region28
        $region27: #{dialogue_act_slot_value_forward.1} parent=11 // pred_region
          _
        $region28: #{dialogue_act_slot_value_forward.1} parent=11 // pred_fallthru
          _
        // Predicated region
        $region29: #{dialogue_act_slot_value_forward.1} parent=11 // pred_check
          %p465 = pneg %p337
        $region30: #{dialogue_act_slot_value_forward.1} parent=11 // pred_check_branch
          %467 = sbr.rel (%p465) target = $region32
        $region31: #{dialogue_act_slot_value_forward.1} parent=11 // pred_region
          _
        $region32: #{dialogue_act_slot_value_forward.1} parent=11 // pred_fallthru
          _
        // Predicated region
        $region33: #{dialogue_act_slot_value_forward.1} parent=11 // pred_check
          %p468 = pneg %p358
        $region34: #{dialogue_act_slot_value_forward.1} parent=11 // pred_check_branch
          %470 = sbr.rel (%p468) target = $region36
        $region35: #{dialogue_act_slot_value_forward.1} parent=11 // pred_region
          _
        $region36: #{dialogue_act_slot_value_forward.1} parent=11 // pred_fallthru
          _
        // Predicated region
        $region37: #{dialogue_act_slot_value_forward.1} parent=11 // pred_check
          %p471 = pneg %p379
        $region38: #{dialogue_act_slot_value_forward.1} parent=11 // pred_check_branch
          %473 = sbr.rel (%p471) target = $region40
        $region39: #{dialogue_act_slot_value_forward.1} parent=11 // pred_region
          %475 = vsyncadd [#allocation9], 0
          %s476 = sshll.u32 %s13, 4
          %s477 = int_to_ptr.hbm [resolvable:$true] %s476
          %s478 = sshll.u32 [#allocation8], 4
          %s479 = int_to_ptr.vmem [resolvable:$true] %s478
          %484 = dma.hbm_to_vmem [thread:$0]  %s477, 1024, %s479, [#allocation9], 64, 64, 4
        $region40: #{dialogue_act_slot_value_forward.1} parent=11 // pred_fallthru
          _
        // Predicated region
        $region41: #{dialogue_act_slot_value_forward.1} parent=11 // pred_check
          %p485 = pneg %p400
        $region42: #{dialogue_act_slot_value_forward.1} parent=11 // pred_check_branch
          %487 = sbr.rel (%p485) target = $region44
        $region43: #{dialogue_act_slot_value_forward.1} parent=11 // pred_region
          _
        $region44: #{dialogue_act_slot_value_forward.1} parent=11 // pred_fallthru
          _
      $region12: #{dialogue_act_slot_value_forward.1} parent=5 // pred_fallthru
        _
      %p488 = scmp.lt.s32.totalorder %s28, 2
      // Predicated region
      $region45: #{dialogue_act_slot_value_forward.1} parent=5 // pred_check
        %p489 = pneg %p488
      $region46: #{dialogue_act_slot_value_forward.1} parent=5 // pred_check_branch
        %491 = sbr.rel (%p489) target = $region48
      $region47: #{dialogue_act_slot_value_forward.1} parent=5 // pred_region
        // Predicated region
        $region49: #{dialogue_act_slot_value_forward.1} parent=47 // pred_check
          %p492 = pneg %p133
        $region50: #{dialogue_act_slot_value_forward.1} parent=47 // pred_check_branch
          %494 = sbr.rel (%p492) target = $region52
        $region51: #{dialogue_act_slot_value_forward.1} parent=47 // pred_region
          %s495 = sand.u32 %s123, 1
          %s496 = scalar_lea.sflag [#allocation4], %s495
          %s497 = sand.u32 %s123, 1
          %s498 = smul.addr %s497, 192
          %s499 = scalar_lea.vmem [#allocation3], %s498
          %501 = vsyncadd %s496, 0
          %s502 = smul.addr %s36, 48
          %s503 = smul.addr %s502, 4
          %s504 = scalar_lea.hbm %s3, %s503
          %s505 = sshll.u32 %s504, 4
          %s506 = int_to_ptr.hbm [resolvable:$true] %s505
          %s507 = sshll.u32 %s499, 4
          %s508 = int_to_ptr.vmem [resolvable:$true] %s507
          %513 = dma.hbm_to_vmem [thread:$0]  %s506, 3072, %s508, %s496, 192, 192, 12
        $region52: #{dialogue_act_slot_value_forward.1} parent=47 // pred_fallthru
          _
        // Predicated region
        $region53: #{dialogue_act_slot_value_forward.1} parent=47 // pred_check
          %p514 = pneg %p159
        $region54: #{dialogue_act_slot_value_forward.1} parent=47 // pred_check_branch
          %516 = sbr.rel (%p514) target = $region56
        $region55: #{dialogue_act_slot_value_forward.1} parent=47 // pred_region
          %p517 = scmp.lt.s32.totalorder %s36, 1
          %s518 = scalar_select %p517, %s36, 1
          %s519 = smul.addr %s518, 3
          %s520 = scalar_lea.vmem %s4, %s519
        $region56: #{dialogue_act_slot_value_forward.1} parent=47 // pred_fallthru
          _
        // Predicated region
        $region57: #{dialogue_act_slot_value_forward.1} parent=47 // pred_check
          %p521 = pneg %p185
        $region58: #{dialogue_act_slot_value_forward.1} parent=47 // pred_check_branch
          %523 = sbr.rel (%p521) target = $region60
        $region59: #{dialogue_act_slot_value_forward.1} parent=47 // pred_region
          %p524 = scmp.lt.s32.totalorder %s36, 1
          %s525 = scalar_select %p524, %s36, 1
          %s526 = smul.addr %s525, 16
          %s527 = smul.addr %s526, 4
          %s528 = scalar_lea.vmem %s5, %s527
        $region60: #{dialogue_act_slot_value_forward.1} parent=47 // pred_fallthru
          _
        // Predicated region
        $region61: #{dialogue_act_slot_value_forward.1} parent=47 // pred_check
          %p529 = pneg %p211
        $region62: #{dialogue_act_slot_value_forward.1} parent=47 // pred_check_branch
          %531 = sbr.rel (%p529) target = $region64
        $region63: #{dialogue_act_slot_value_forward.1} parent=47 // pred_region
          %s532 = sand.u32 %s28, 1
          %s533 = scalar_lea.sflag [#allocation6], %s532
          %s534 = sand.u32 %s201, 1
          %s535 = smul.addr %s534, 128
          %s536 = scalar_lea.vmem [#allocation5], %s535
          %538 = vsyncadd %s533, 0
          %s539 = smul.addr %s36, 32
          %s540 = smul.addr %s539, 4
          %s541 = scalar_lea.hbm %s6, %s540
          %s542 = sshll.u32 %s541, 4
          %s543 = int_to_ptr.hbm [resolvable:$true] %s542
          %s544 = sshll.u32 %s536, 4
          %s545 = int_to_ptr.vmem [resolvable:$true] %s544
          %550 = dma.hbm_to_vmem [thread:$0]  %s543, 2048, %s545, %s533, 128, 128, 8
        $region64: #{dialogue_act_slot_value_forward.1} parent=47 // pred_fallthru
          _
        // Predicated region
        $region65: #{dialogue_act_slot_value_forward.1} parent=47 // pred_check
          %p551 = pneg %p237
        $region66: #{dialogue_act_slot_value_forward.1} parent=47 // pred_check_branch
          %553 = sbr.rel (%p551) target = $region68
        $region67: #{dialogue_act_slot_value_forward.1} parent=47 // pred_region
          %p554 = scmp.lt.s32.totalorder %s36, 1
          %s555 = scalar_select %p554, %s36, 1
          %s556 = smul.addr %s555, 2
          %s557 = scalar_lea.vmem %s7, %s556
        $region68: #{dialogue_act_slot_value_forward.1} parent=47 // pred_fallthru
          _
        // Predicated region
        $region69: #{dialogue_act_slot_value_forward.1} parent=47 // pred_check
          %p558 = pneg %p263
        $region70: #{dialogue_act_slot_value_forward.1} parent=47 // pred_check_branch
          %560 = sbr.rel (%p558) target = $region72
        $region71: #{dialogue_act_slot_value_forward.1} parent=47 // pred_region
          %s561 = sand.u32 %s28, 1
          %s562 = scalar_lea.sflag [#allocation6], %s561
          %s563 = sand.u32 %s253, 1
          %s564 = smul.addr %s563, 128
          %s565 = scalar_lea.vmem [#allocation7], %s564
          %567 = vsyncadd %s562, 0
          %s568 = smul.addr %s36, 32
          %s569 = smul.addr %s568, 4
          %s570 = scalar_lea.hbm %s8, %s569
          %s571 = sshll.u32 %s570, 4
          %s572 = int_to_ptr.hbm [resolvable:$true] %s571
          %s573 = sshll.u32 %s565, 4
          %s574 = int_to_ptr.vmem [resolvable:$true] %s573
          %579 = dma.hbm_to_vmem [thread:$0]  %s572, 2048, %s574, %s562, 64, 64, 4
        $region72: #{dialogue_act_slot_value_forward.1} parent=47 // pred_fallthru
          _
        // Predicated region
        $region73: #{dialogue_act_slot_value_forward.1} parent=47 // pred_check
          %p580 = pneg %p289
        $region74: #{dialogue_act_slot_value_forward.1} parent=47 // pred_check_branch
          %582 = sbr.rel (%p580) target = $region76
        $region75: #{dialogue_act_slot_value_forward.1} parent=47 // pred_region
          %p583 = scmp.lt.s32.totalorder %s36, 1
          %s584 = scalar_select %p583, %s36, 1
          %s585 = smul.addr %s584, 8
          %s586 = scalar_lea.vmem %s9, %s585
        $region76: #{dialogue_act_slot_value_forward.1} parent=47 // pred_fallthru
          _
      $region48: #{dialogue_act_slot_value_forward.1} parent=5 // pred_fallthru
        _
      %p587 = scmp.le.s32.totalorder 1, %s28
      %p588 = scmp.lt.s32.totalorder %s28, 3
      %p589 = pnand %p587, %p588
      %p590 = pneg %p589
      // Predicated region
      $region77: #{dialogue_act_slot_value_forward.1} parent=5 // pred_check
        _
      $region78: #{dialogue_act_slot_value_forward.1} parent=5 // pred_check_branch
        %592 = sbr.rel (%p589) target = $region80
      $region79: #{dialogue_act_slot_value_forward.1} parent=5 // pred_region
        %s593 = ssub.s32 %s28, 1
        %s594 = sand.u32 %s126, 1
        %s595 = scalar_lea.sflag [#allocation4], %s594
        %s596 = sand.u32 %s126, 1
        %s597 = smul.addr %s596, 192
        %s598 = scalar_lea.vmem [#allocation3], %s597
        // Predicated region
        $region81: #{dialogue_act_slot_value_forward.1} parent=79 // pred_check
          %p599 = pneg %p139
        $region82: #{dialogue_act_slot_value_forward.1} parent=79 // pred_check_branch
          %601 = sbr.rel (%p599) target = $region84
        $region83: #{dialogue_act_slot_value_forward.1} parent=79 // pred_region
          %603 = dma.done %s595, 3072
        $region84: #{dialogue_act_slot_value_forward.1} parent=79 // pred_fallthru
          _
        %s604 = sand.u32 %s33, 1
        %s605 = scalar_lea.sflag [#allocation6], %s604
        %s606 = sand.u32 %s204, 1
        %s607 = smul.addr %s606, 128
        %s608 = scalar_lea.vmem [#allocation5], %s607
        // Predicated region
        $region85: #{dialogue_act_slot_value_forward.1} parent=79 // pred_check
          %p609 = pneg %p217
        $region86: #{dialogue_act_slot_value_forward.1} parent=79 // pred_check_branch
          %611 = sbr.rel (%p609) target = $region88
        $region87: #{dialogue_act_slot_value_forward.1} parent=79 // pred_region
          %613 = dma.done %s605, 2048
        $region88: #{dialogue_act_slot_value_forward.1} parent=79 // pred_fallthru
          _
        %s614 = sand.u32 %s33, 1
        %s615 = scalar_lea.sflag [#allocation6], %s614
        %s616 = sand.u32 %s256, 1
        %s617 = smul.addr %s616, 128
        %s618 = scalar_lea.vmem [#allocation7], %s617
        // Predicated region
        $region89: #{dialogue_act_slot_value_forward.1} parent=79 // pred_check
          %p619 = pneg %p269
        $region90: #{dialogue_act_slot_value_forward.1} parent=79 // pred_check_branch
          %621 = sbr.rel (%p619) target = $region92
        $region91: #{dialogue_act_slot_value_forward.1} parent=79 // pred_region
          %623 = dma.done %s615, 2048
        $region92: #{dialogue_act_slot_value_forward.1} parent=79 // pred_fallthru
          _
        // Predicated region
        $region93: #{dialogue_act_slot_value_forward.1} parent=79 // pred_check
          %p624 = pneg %p379
        $region94: #{dialogue_act_slot_value_forward.1} parent=79 // pred_check_branch
          %626 = sbr.rel (%p624) target = $region96
        $region95: #{dialogue_act_slot_value_forward.1} parent=79 // pred_region
          %628 = dma.done [#allocation9], 1024
        $region96: #{dialogue_act_slot_value_forward.1} parent=79 // pred_fallthru
          _
        %s629 = smul.u32 2, %s37
        %p630 = scmp.lt.s32.totalorder %s629, 1
        %s631 = scalar_select %p630, %s629, 1
        %s632 = smul.addr %s631, 8
        %s633 = scalar_lea.vmem %s0, %s632
        %p634 = pneg %p66
        %p635 = pneg %p63
        %p636 = pneg %p87
        %p637 = pneg %p84
        %s638 = smul.u32 2, %s37
        %p639 = scmp.lt.s32.totalorder %s638, 1
        %s640 = scalar_select %p639, %s638, 1
        %s641 = smul.addr %s640, 8
        %s642 = scalar_lea.vmem %s2, %s641
        %p643 = pneg %p113
        %p644 = pneg %p110
        %s645 = sand.u32 %s126, 1
        %s646 = scalar_lea.sflag [#allocation4], %s645
        %s647 = sand.u32 %s126, 1
        %s648 = smul.addr %s647, 192
        %s649 = scalar_lea.vmem [#allocation3], %s648
        %p650 = pneg %p139
        %p651 = pneg %p136
        %p652 = scmp.lt.s32.totalorder %s38, 1
        %s653 = scalar_select %p652, %s38, 1
        %s654 = smul.addr %s653, 3
        %s655 = scalar_lea.vmem %s4, %s654
        %p656 = pneg %p165
        %p657 = pneg %p162
        %p658 = scmp.lt.s32.totalorder %s38, 1
        %s659 = scalar_select %p658, %s38, 1
        %s660 = smul.addr %s659, 16
        %s661 = smul.addr %s660, 4
        %s662 = scalar_lea.vmem %s5, %s661
        %p663 = pneg %p191
        %p664 = pneg %p188
        %s665 = sand.u32 %s33, 1
        %s666 = scalar_lea.sflag [#allocation6], %s665
        %s667 = sand.u32 %s204, 1
        %s668 = smul.addr %s667, 128
        %s669 = scalar_lea.vmem [#allocation5], %s668
        %p670 = pneg %p217
        %p671 = pneg %p214
        %p672 = scmp.lt.s32.totalorder %s38, 1
        %s673 = scalar_select %p672, %s38, 1
        %s674 = smul.addr %s673, 2
        %s675 = scalar_lea.vmem %s7, %s674
        %p676 = pneg %p243
        %p677 = pneg %p240
        %s678 = sand.u32 %s33, 1
        %s679 = scalar_lea.sflag [#allocation6], %s678
        %s680 = sand.u32 %s256, 1
        %s681 = smul.addr %s680, 128
        %s682 = scalar_lea.vmem [#allocation7], %s681
        %p683 = pneg %p269
        %p684 = pneg %p266
        %p685 = scmp.lt.s32.totalorder %s38, 1
        %s686 = scalar_select %p685, %s38, 1
        %s687 = smul.addr %s686, 8
        %s688 = scalar_lea.vmem %s9, %s687
        %p689 = pneg %p295
        %p690 = pneg %p292
        %p691 = pneg %p316
        %p692 = pneg %p313
        %p693 = pneg %p337
        %p694 = pneg %p334
        %p695 = pneg %p358
        %p696 = pneg %p355
        %p697 = pneg %p379
        %p698 = pneg %p376
        %p699 = pneg %p400
        %p700 = pneg %p397
        %p701 = pneg %p426
        %p702 = pneg %p423
        %p703 = scmp.lt.s32.totalorder %s37, 0
        %s704 = scalar_select %p703, %s37, 0
        %s705 = smul.addr %s704, 2
        %s706 = scalar_lea.vmem %s15, %s705
        %s707 = smul.u32 2, %s37
        %p708 = scmp.lt.s32.totalorder %s707, 1
        %s709 = scalar_select %p708, %s707, 1
        %s710 = smul.addr %s709, 8
        %s711 = scalar_lea.vmem %s0, %s710
        %s712 = smul.u32 2, %s37
        %s713 = smul.u32 2, %s37
        %p714 = scmp.lt.s32.totalorder %s713, 1
        %s715 = scalar_select %p714, %s713, 1
        %s716 = smul.addr %s715, 8
        %s717 = scalar_lea.vmem %s2, %s716
        %s718 = smul.u32 2, %s37
        %p719 = scmp.lt.s32.totalorder %s38, 1
        %s720 = scalar_select %p719, %s38, 1
        %s721 = smul.addr %s720, 3
        %s722 = scalar_lea.vmem %s4, %s721
        %p723 = scmp.lt.s32.totalorder %s38, 1
        %s724 = scalar_select %p723, %s38, 1
        %s725 = smul.addr %s724, 16
        %s726 = smul.addr %s725, 4
        %s727 = scalar_lea.vmem %s5, %s726
        %p728 = scmp.lt.s32.totalorder %s38, 1
        %s729 = scalar_select %p728, %s38, 1
        %s730 = smul.addr %s729, 2
        %s731 = scalar_lea.vmem %s7, %s730
        %p732 = scmp.lt.s32.totalorder %s38, 1
        %s733 = scalar_select %p732, %s38, 1
        %s734 = smul.addr %s733, 8
        %s735 = scalar_lea.vmem %s9, %s734
        %p736 = scmp.lt.s32.totalorder %s37, 0
        %s737 = scalar_select %p736, %s37, 0
        %s738 = smul.addr %s737, 2
        %s739 = scalar_lea.vmem %s15, %s738
        %p741 = scmp.eq.s32.totalorder %s38, 0
        // Predicated region
        $region97: #{dialogue_act_slot_value_forward.1} parent=79 // pred_check
          %p742 = pneg %p741
        $region98: #{dialogue_act_slot_value_forward.1} parent=79 // pred_check_branch
          %744 = sbr.rel (%p742) target = $region100
        $region99: #{dialogue_act_slot_value_forward.1} parent=79 // pred_region
          %v745 = vld [vmem:[%s1] sm:$0xff]
          %v746 = vld [vmem:[%s711] sm:$0xff]
          %v747 = vld [vmem:[%s711 + $0x8] sm:$0xff]
          %v748 = vadd.f32 %v746, %v745
          %v749 = vadd.f32 %v747, %v745
          %v750 = vld [vmem:[%s10] sm:$0x1]
          %v751 = vld [vmem:[%s10 + $0x1] sm:$0x1]
          %752 = vadd.xlane.f32.xlu0 %v748
          %v753 = vpop.xlane.xlu0 %752
          %754 = vadd.xlane.f32.xlu0 %v749
          %v755 = vpop.xlane.xlu0 %754
          %v756 = vrcp.pop 128.0
          %v757 = vmul.f32 128.0, %v756
          %v758 = vsub.f32 1.0, %v757
          %v759 = vmul.f32 %v756, %v758
          %v760 = vadd.f32 %v756, %v759
          %vm761 = vweird.f32 %v756
          %v762 = vsel %vm761, %v756, %v760
          %v763 = vmul.f32 %v753, %v762
          %v764 = vmul.f32 %v755, %v762
          %v765 = vsub.f32 %v748, %v763
          %v766 = vsub.f32 %v749, %v764
          %v767 = vmul.f32 %v765, %v765
          %v768 = vmul.f32 %v766, %v766
          %769 = vadd.xlane.f32.xlu0 %v767
          %v770 = vpop.xlane.xlu0 %769
          %771 = vadd.xlane.f32.xlu0 %v768
          %v772 = vpop.xlane.xlu0 %771
          %v773 = vmul.f32 %v770, %v762
          %v774 = vmul.f32 %v772, %v762
          %v775 = vadd.f32 %v773, 1e-12
          %v776 = vadd.f32 %v774, 1e-12
          %v777 = vrsqrt.pop %v775
          %v778 = vmul.f32 %v777, %v775
          %v779 = vmul.f32 %v778, %v777
          %v780 = vmul.f32 0.5, %v779
          %v781 = vsub.f32 1.5, %v780
          %v782 = vmul.f32 %v777, %v781
          %vm783 = vweird.f32 %v775
          %vm784 = vweird.f32 %v777
          %vm785 = vmor %vm783, %vm784
          %v786 = vsel %vm785, %v777, %v782
          %v787 = vrsqrt.pop %v776
          %v788 = vmul.f32 %v787, %v776
          %v789 = vmul.f32 %v788, %v787
          %v790 = vmul.f32 0.5, %v789
          %v791 = vsub.f32 1.5, %v790
          %v792 = vmul.f32 %v787, %v791
          %vm793 = vweird.f32 %v776
          %vm794 = vweird.f32 %v787
          %vm795 = vmor %vm793, %vm794
          %v796 = vsel %vm795, %v787, %v792
          %v797 = vmul.f32 %v765, %v786
          %v798 = vmul.f32 %v766, %v796
          %v799 = vperm.slane %v750, 0
          %v800 = vmul.f32 %v797, %v799
          %v801 = vmul.f32 %v798, %v799
          %v802 = vperm.slane %v751, 0
          %v803 = vadd.f32 %v800, %v802
          %v804 = vadd.f32 %v801, %v802
          %805 = vst [vmem:[#allocation2] sm:$0xff] %v803
          %806 = vst [vmem:[#allocation2 + $0x8] sm:$0xff] %v804
        $region100: #{dialogue_act_slot_value_forward.1} parent=79 // pred_fallthru
          _
        %v807 = vld [vmem:[#allocation2] sm:$0xff]
        %v808 = vld [vmem:[#allocation2 + $0x8] sm:$0xff]
        %v809 = vld [vmem:[%s735] sm:$0x3f]
        %v810 = vpack.c.bf16 %v808, %v807
        %v811 = vld [vmem:[%s598] sm:$0xff]
        %v812 = vld [vmem:[%s598 + $0x8] sm:$0xf]
        %v813 = vld [vmem:[%s598 + $0xc] sm:$0xff]
        %v814 = vld [vmem:[%s598 + $0x14] sm:$0xf]
        %v815 = vld [vmem:[%s598 + $0x18] sm:$0xff]
        %v816 = vld [vmem:[%s598 + $0x20] sm:$0xf]
        %v817 = vld [vmem:[%s598 + $0x24] sm:$0xff]
        %v818 = vld [vmem:[%s598 + $0x2c] sm:$0xf]
        %v819 = vld [vmem:[%s598 + $0x30] sm:$0xff]
        %v820 = vld [vmem:[%s598 + $0x38] sm:$0xf]
        %v821 = vld [vmem:[%s598 + $0x3c] sm:$0xff]
        %v822 = vld [vmem:[%s598 + $0x44] sm:$0xf]
        %v823 = vld [vmem:[%s598 + $0x48] sm:$0xff]
        %v824 = vld [vmem:[%s598 + $0x50] sm:$0xf]
        %v825 = vld [vmem:[%s598 + $0x54] sm:$0xff]
        %v826 = vld [vmem:[%s598 + $0x5c] sm:$0xf]
        %v827 = vld [vmem:[%s598 + $0x60] sm:$0xff]
        %v828 = vld [vmem:[%s598 + $0x68] sm:$0xf]
        %v829 = vld [vmem:[%s598 + $0x6c] sm:$0xff]
        %v830 = vld [vmem:[%s598 + $0x74] sm:$0xf]
        %v831 = vld [vmem:[%s598 + $0x78] sm:$0xff]
        %v832 = vld [vmem:[%s598 + $0x80] sm:$0xf]
        %v833 = vld [vmem:[%s598 + $0x84] sm:$0xff]
        %v834 = vld [vmem:[%s598 + $0x8c] sm:$0xf]
        %v835 = vld [vmem:[%s598 + $0x90] sm:$0xff]
        %v836 = vld [vmem:[%s598 + $0x98] sm:$0xf]
        %v837 = vld [vmem:[%s598 + $0x9c] sm:$0xff]
        %v838 = vld [vmem:[%s598 + $0xa4] sm:$0xf]
        %v839 = vld [vmem:[%s598 + $0xa8] sm:$0xff]
        %v840 = vld [vmem:[%s598 + $0xb0] sm:$0xf]
        %v841 = vld [vmem:[%s598 + $0xb4] sm:$0xff]
        %v842 = vld [vmem:[%s598 + $0xbc] sm:$0xf]
        %v843 = vld [vmem:[%s722] sm:$0x7]
        %v845 = vperm.slane %v843, 0
        %v846 = vperm.slane %v843, 1
        %v847 = vperm.slane %v843, 2
        %v883 = vunpack.c.l.b16 %v811
        %v884 = vunpack.c.h.b16 %v811
        %v885 = vunpack.c.l.b16 %v812
        %v886 = vunpack.c.l.b16 %v813
        %v887 = vunpack.c.h.b16 %v813
        %v888 = vunpack.c.l.b16 %v814
        %v889 = vunpack.c.l.b16 %v815
        %v890 = vunpack.c.h.b16 %v815
        %v891 = vunpack.c.l.b16 %v816
        %v892 = vunpack.c.l.b16 %v817
        %v893 = vunpack.c.h.b16 %v817
        %v894 = vunpack.c.l.b16 %v818
        %v895 = vunpack.c.l.b16 %v819
        %v896 = vunpack.c.h.b16 %v819
        %v897 = vunpack.c.l.b16 %v820
        %v898 = vunpack.c.l.b16 %v821
        %v899 = vunpack.c.h.b16 %v821
        %v900 = vunpack.c.l.b16 %v822
        %v901 = vunpack.c.l.b16 %v823
        %v902 = vunpack.c.h.b16 %v823
        %v903 = vunpack.c.l.b16 %v824
        %v904 = vunpack.c.l.b16 %v825
        %v905 = vunpack.c.h.b16 %v825
        %v906 = vunpack.c.l.b16 %v826
        %v907 = vunpack.c.l.b16 %v827
        %v908 = vunpack.c.h.b16 %v827
        %v909 = vunpack.c.l.b16 %v828
        %v910 = vunpack.c.l.b16 %v829
        %v911 = vunpack.c.h.b16 %v829
        %v912 = vunpack.c.l.b16 %v830
        %v913 = vunpack.c.l.b16 %v831
        %v914 = vunpack.c.h.b16 %v831
        %v915 = vunpack.c.l.b16 %v832
        %v916 = vunpack.c.l.b16 %v833
        %v917 = vunpack.c.h.b16 %v833
        %v918 = vunpack.c.l.b16 %v834
        %v919 = vunpack.c.l.b16 %v835
        %v920 = vunpack.c.h.b16 %v835
        %v921 = vunpack.c.l.b16 %v836
        %v922 = vunpack.c.l.b16 %v837
        %v923 = vunpack.c.h.b16 %v837
        %v924 = vunpack.c.l.b16 %v838
        %v925 = vunpack.c.l.b16 %v839
        %v926 = vunpack.c.h.b16 %v839
        %v927 = vunpack.c.l.b16 %v840
        %v928 = vunpack.c.l.b16 %v841
        %v929 = vunpack.c.h.b16 %v841
        %v930 = vunpack.c.l.b16 %v842
        %v931 = vpack.c.b16 %v886, %v883
        %v932 = vpack.c.b16 %v887, %v884
        %v933 = vpack.c.b16 %v888, %v885
        %v934 = vpack.c.b16 %v892, %v889
        %v935 = vpack.c.b16 %v893, %v890
        %v936 = vpack.c.b16 %v894, %v891
        %v937 = vpack.c.b16 %v898, %v895
        %v938 = vpack.c.b16 %v899, %v896
        %v939 = vpack.c.b16 %v900, %v897
        %v940 = vpack.c.b16 %v904, %v901
        %v941 = vpack.c.b16 %v905, %v902
        %v942 = vpack.c.b16 %v906, %v903
        %v943 = vpack.c.b16 %v910, %v907
        %v944 = vpack.c.b16 %v911, %v908
        %v945 = vpack.c.b16 %v912, %v909
        %v946 = vpack.c.b16 %v916, %v913
        %v947 = vpack.c.b16 %v917, %v914
        %v948 = vpack.c.b16 %v918, %v915
        %v949 = vpack.c.b16 %v922, %v919
        %v950 = vpack.c.b16 %v923, %v920
        %v951 = vpack.c.b16 %v924, %v921
        %v952 = vpack.c.b16 %v928, %v925
        %v953 = vpack.c.b16 %v929, %v926
        %v954 = vpack.c.b16 %v930, %v927
        %979 = vmatpush.bf16.msra.mxu0 %v952
        %980 = vmatpush.bf16.msra.mxu0 %v949
        %981 = vmatpush.bf16.msra.mxu0 %v946
        %982 = vmatpush.bf16.msra.mxu0 %v943
        %983 = vmatpush.bf16.msra.mxu0 %v940
        %984 = vmatpush.bf16.msra.mxu0 %v937
        %985 = vmatpush.bf16.msra.mxu0 %v934
        %986 = vmatpush.bf16.msra.mxu0 %v931
        %987 = vmatmul.bf16.gmra.mxu0 %v810
        %v988 = vpop.f32.mrf.mxu0
        %v989 = vadd.f32 %v845, %v988
        %v990 = vpop.f32.mrf.mxu0
        %v991 = vadd.f32 %v845, %v990
        %992 = vdwg.mxu0
        %993 = vmatpush.bf16.msra.mxu0 %v953
        %994 = vmatpush.bf16.msra.mxu0 %v950
        %995 = vmatpush.bf16.msra.mxu0 %v947
        %996 = vmatpush.bf16.msra.mxu0 %v944
        %997 = vmatpush.bf16.msra.mxu0 %v941
        %998 = vmatpush.bf16.msra.mxu0 %v938
        %999 = vmatpush.bf16.msra.mxu0 %v935
        %1000 = vmatpush.bf16.msra.mxu0 %v932
        %1001 = vmatmul.bf16.gmra.mxu0 %v810
        %v1002 = vpop.f32.mrf.mxu0
        %v1003 = vadd.f32 %v846, %v1002
        %v1004 = vpop.f32.mrf.mxu0
        %v1005 = vadd.f32 %v846, %v1004
        %1006 = vdwg.mxu0
        %1007 = vmatpush.bf16.msra.mxu0 %v954
        %1008 = vmatpush.bf16.msra.mxu0 %v951
        %1009 = vmatpush.bf16.msra.mxu0 %v948
        %1010 = vmatpush.bf16.msra.mxu0 %v945
        %1011 = vmatpush.bf16.msra.mxu0 %v942
        %1012 = vmatpush.bf16.msra.mxu0 %v939
        %1013 = vmatpush.bf16.msra.mxu0 %v936
        %1014 = vmatpush.bf16.msra.mxu0 %v933
        %1015 = vmatmul.bf16.gmra.mxu0 %v810
        %v1016 = vpop.f32.mrf.mxu0
        %v1017 = vadd.f32 %v847, %v1016
        %v1018 = vpop.f32.mrf.mxu0
        %v1019 = vadd.f32 %v847, %v1018
        %1020 = vdwg.mxu0
        %v1021 = vld [vmem:[%s717] sm:$0xff]
        %v1022 = vpack.c.bf16 %v989, %v989
        %v1023 = vpack.c.bf16 %v1003, %v1003
        %vm1024 = vcmask 523264
        %v1026 = vsel %vm1024, %v1022, 0
        %v1029 = vsel %vm1024, %v1023, 0
        %1031 = vmatpush.bf16.xpose.msra.mxu0 0
        %1032 = vmatpush.bf16.xpose.msra.mxu0 0
        %1033 = vmatpush.bf16.xpose.msra.mxu0 0
        %1034 = vmatpush.bf16.xpose.msra.mxu0 0
        %1035 = vmatpush.bf16.xpose.msra.mxu0 0
        %1036 = vmatpush.bf16.xpose.msra.mxu0 0
        %1037 = vmatpush.bf16.xpose.msra.mxu0 0
        %1038 = vmatpush.bf16.xpose.msra.mxu0 %v1029
        %1039 = vmatmul.bf16.gmra.mxu0 %v1026
        %v1040 = vpop.f32.mrf.mxu0
        %v1041 = vadd.f32 %v1021, %v1040
        %v1042 = vpop.f32.mrf.mxu0
        %1043 = vdwg.mxu0
        %vm1044 = vcmask 64512
        %v1045 = vsel %vm1044, %v1041, -inf
        %1046 = vmax.xlane.f32.xlu0 %v1045
        %v1047 = vpop.xlane.xlu0 %1046
        %v1048 = vsub.f32 %v1041, %v1047
        %v1049 = vmul.f32 %v1048, 1.442695
        %v1050 = vpow.pop %v1049
        %v1051 = vsel %vm1044, %v1050, 0.0
        %1052 = vadd.xlane.f32.xlu0 %v1051
        %v1053 = vpop.xlane.xlu0 %1052
        %v1054 = vrcp.pop %v1053
        %v1055 = vmul.f32 %v1050, %v1054
        %v1056 = vpack.c.bf16 %v1055, %v1055
        %v1057 = vpack.c.bf16 %v1017, %v1017
        %v1059 = vsel %vm1044, %v1056, 0
        %vm1061 = vcmask 1043456
        %v1063 = vsel %vm1061, %v1057, 0
        %1065 = vmatpush.bf16.msra.mxu0 0
        %1066 = vmatpush.bf16.msra.mxu0 0
        %1067 = vmatpush.bf16.msra.mxu0 0
        %1068 = vmatpush.bf16.msra.mxu0 0
        %1069 = vmatpush.bf16.msra.mxu0 0
        %1070 = vmatpush.bf16.msra.mxu0 0
        %1071 = vmatpush.bf16.msra.mxu0 0
        %1072 = vmatpush.bf16.msra.mxu0 %v1063
        %1073 = vmatmul.bf16.gmra.mxu0 %v1059
        %v1074 = vpop.f32.mrf.mxu0
        %v1075 = vadd.f32 0.0, %v1074
        %v1076 = vpop.f32.mrf.mxu0
        %1077 = vdwg.mxu0
        %1079 = vrot.lane.b32.xlu0 %v1022, 64
        %v1080 = vpop.permute.xlu0 %1079
        %1082 = vrot.lane.b32.xlu0 %v1023, 64
        %v1083 = vpop.permute.xlu0 %1082
        %v1085 = vsel %vm1024, %v1080, 0
        %v1088 = vsel %vm1024, %v1083, 0
        %1090 = vmatpush.bf16.xpose.msra.mxu0 0
        %1091 = vmatpush.bf16.xpose.msra.mxu0 0
        %1092 = vmatpush.bf16.xpose.msra.mxu0 0
        %1093 = vmatpush.bf16.xpose.msra.mxu0 0
        %1094 = vmatpush.bf16.xpose.msra.mxu0 0
        %1095 = vmatpush.bf16.xpose.msra.mxu0 0
        %1096 = vmatpush.bf16.xpose.msra.mxu0 0
        %1097 = vmatpush.bf16.xpose.msra.mxu0 %v1088
        %1098 = vmatmul.bf16.gmra.mxu0 %v1085
        %v1099 = vpop.f32.mrf.mxu0
        %v1100 = vadd.f32 %v1021, %v1099
        %v1101 = vpop.f32.mrf.mxu0
        %1102 = vdwg.mxu0
        %v1103 = vsel %vm1044, %v1100, -inf
        %1104 = vmax.xlane.f32.xlu0 %v1103
        %v1105 = vpop.xlane.xlu0 %1104
        %v1106 = vsub.f32 %v1100, %v1105
        %v1107 = vmul.f32 %v1106, 1.442695
        %v1108 = vpow.pop %v1107
        %v1109 = vsel %vm1044, %v1108, 0.0
        %1110 = vadd.xlane.f32.xlu0 %v1109
        %v1111 = vpop.xlane.xlu0 %1110
        %v1112 = vrcp.pop %v1111
        %v1113 = vmul.f32 %v1108, %v1112
        %v1114 = vpack.c.bf16 %v1113, %v1113
        %1116 = vrot.lane.b32.xlu0 %v1057, 64
        %v1117 = vpop.permute.xlu0 %1116
        %v1119 = vsel %vm1044, %v1114, 0
        %v1122 = vsel %vm1061, %v1117, 0
        %1124 = vmatpush.bf16.msra.mxu0 0
        %1125 = vmatpush.bf16.msra.mxu0 0
        %1126 = vmatpush.bf16.msra.mxu0 0
        %1127 = vmatpush.bf16.msra.mxu0 0
        %1128 = vmatpush.bf16.msra.mxu0 0
        %1129 = vmatpush.bf16.msra.mxu0 0
        %1130 = vmatpush.bf16.msra.mxu0 0
        %1131 = vmatpush.bf16.msra.mxu0 %v1122
        %1132 = vmatmul.bf16.gmra.mxu0 %v1119
        %v1133 = vpop.f32.mrf.mxu0
        %v1134 = vadd.f32 0.0, %v1133
        %v1135 = vpop.f32.mrf.mxu0
        %1136 = vdwg.mxu0
        %1138 = vrot.lane.b32.xlu0 %v1134, 64
        %v1139 = vpop.permute.xlu0 %1138
        %v1141 = vsel %vm1024, %v1075, %v1139
        %s1142 = scalar_lea.vmem %s717, 8
        %v1143 = vld [vmem:[%s1142] sm:$0xff]
        %v1144 = vpack.c.bf16 %v991, %v991
        %v1145 = vpack.c.bf16 %v1005, %v1005
        %v1147 = vsel %vm1024, %v1144, 0
        %v1150 = vsel %vm1024, %v1145, 0
        %1152 = vmatpush.bf16.xpose.msra.mxu0 0
        %1153 = vmatpush.bf16.xpose.msra.mxu0 0
        %1154 = vmatpush.bf16.xpose.msra.mxu0 0
        %1155 = vmatpush.bf16.xpose.msra.mxu0 0
        %1156 = vmatpush.bf16.xpose.msra.mxu0 0
        %1157 = vmatpush.bf16.xpose.msra.mxu0 0
        %1158 = vmatpush.bf16.xpose.msra.mxu0 0
        %1159 = vmatpush.bf16.xpose.msra.mxu0 %v1150
        %1160 = vmatmul.bf16.gmra.mxu0 %v1147
        %v1161 = vpop.f32.mrf.mxu0
        %v1162 = vadd.f32 %v1143, %v1161
        %v1163 = vpop.f32.mrf.mxu0
        %1164 = vdwg.mxu0
        %v1165 = vsel %vm1044, %v1162, -inf
        %1166 = vmax.xlane.f32.xlu0 %v1165
        %v1167 = vpop.xlane.xlu0 %1166
        %v1168 = vsub.f32 %v1162, %v1167
        %v1169 = vmul.f32 %v1168, 1.442695
        %v1170 = vpow.pop %v1169
        %v1171 = vsel %vm1044, %v1170, 0.0
        %1172 = vadd.xlane.f32.xlu0 %v1171
        %v1173 = vpop.xlane.xlu0 %1172
        %v1174 = vrcp.pop %v1173
        %v1175 = vmul.f32 %v1170, %v1174
        %v1176 = vpack.c.bf16 %v1175, %v1175
        %v1177 = vpack.c.bf16 %v1019, %v1019
        %v1179 = vsel %vm1044, %v1176, 0
        %v1182 = vsel %vm1061, %v1177, 0
        %1184 = vmatpush.bf16.msra.mxu0 0
        %1185 = vmatpush.bf16.msra.mxu0 0
        %1186 = vmatpush.bf16.msra.mxu0 0
        %1187 = vmatpush.bf16.msra.mxu0 0
        %1188 = vmatpush.bf16.msra.mxu0 0
        %1189 = vmatpush.bf16.msra.mxu0 0
        %1190 = vmatpush.bf16.msra.mxu0 0
        %1191 = vmatpush.bf16.msra.mxu0 %v1182
        %1192 = vmatmul.bf16.gmra.mxu0 %v1179
        %v1193 = vpop.f32.mrf.mxu0
        %v1194 = vadd.f32 0.0, %v1193
        %v1195 = vpop.f32.mrf.mxu0
        %1196 = vdwg.mxu0
        %1198 = vrot.lane.b32.xlu0 %v1144, 64
        %v1199 = vpop.permute.xlu0 %1198
        %1201 = vrot.lane.b32.xlu0 %v1145, 64
        %v1202 = vpop.permute.xlu0 %1201
        %v1204 = vsel %vm1024, %v1199, 0
        %v1207 = vsel %vm1024, %v1202, 0
        %1209 = vmatpush.bf16.xpose.msra.mxu0 0
        %1210 = vmatpush.bf16.xpose.msra.mxu0 0
        %1211 = vmatpush.bf16.xpose.msra.mxu0 0
        %1212 = vmatpush.bf16.xpose.msra.mxu0 0
        %1213 = vmatpush.bf16.xpose.msra.mxu0 0
        %1214 = vmatpush.bf16.xpose.msra.mxu0 0
        %1215 = vmatpush.bf16.xpose.msra.mxu0 0
        %1216 = vmatpush.bf16.xpose.msra.mxu0 %v1207
        %1217 = vmatmul.bf16.gmra.mxu0 %v1204
        %v1218 = vpop.f32.mrf.mxu0
        %v1219 = vadd.f32 %v1143, %v1218
        %v1220 = vpop.f32.mrf.mxu0
        %1221 = vdwg.mxu0
        %v1222 = vsel %vm1044, %v1219, -inf
        %1223 = vmax.xlane.f32.xlu0 %v1222
        %v1224 = vpop.xlane.xlu0 %1223
        %v1225 = vsub.f32 %v1219, %v1224
        %v1226 = vmul.f32 %v1225, 1.442695
        %v1227 = vpow.pop %v1226
        %v1228 = vsel %vm1044, %v1227, 0.0
        %1229 = vadd.xlane.f32.xlu0 %v1228
        %v1230 = vpop.xlane.xlu0 %1229
        %v1231 = vrcp.pop %v1230
        %v1232 = vmul.f32 %v1227, %v1231
        %v1233 = vpack.c.bf16 %v1232, %v1232
        %1235 = vrot.lane.b32.xlu0 %v1177, 64
        %v1236 = vpop.permute.xlu0 %1235
        %v1238 = vsel %vm1044, %v1233, 0
        %v1241 = vsel %vm1061, %v1236, 0
        %1243 = vmatpush.bf16.msra.mxu0 0
        %1244 = vmatpush.bf16.msra.mxu0 0
        %1245 = vmatpush.bf16.msra.mxu0 0
        %1246 = vmatpush.bf16.msra.mxu0 0
        %1247 = vmatpush.bf16.msra.mxu0 0
        %1248 = vmatpush.bf16.msra.mxu0 0
        %1249 = vmatpush.bf16.msra.mxu0 0
        %1250 = vmatpush.bf16.msra.mxu0 %v1241
        %1251 = vmatmul.bf16.gmra.mxu0 %v1238
        %v1252 = vpop.f32.mrf.mxu0
        %v1253 = vadd.f32 0.0, %v1252
        %v1254 = vpop.f32.mrf.mxu0
        %1255 = vdwg.mxu0
        %1257 = vrot.lane.b32.xlu0 %v1253, 64
        %v1258 = vpop.permute.xlu0 %1257
        %v1260 = vsel %vm1024, %v1194, %v1258
        %v1261 = vpack.c.bf16 %v1260, %v1141
        %v1262 = vld [vmem:[%s727] sm:$0xf]
        %v1263 = vld [vmem:[%s727 + $0x4] sm:$0xf]
        %v1264 = vld [vmem:[%s727 + $0x8] sm:$0xf]
        %v1265 = vld [vmem:[%s727 + $0xc] sm:$0xf]
        %v1266 = vld [vmem:[%s727 + $0x10] sm:$0xf]
        %v1267 = vld [vmem:[%s727 + $0x14] sm:$0xf]
        %v1268 = vld [vmem:[%s727 + $0x18] sm:$0xf]
        %v1269 = vld [vmem:[%s727 + $0x1c] sm:$0xf]
        %v1270 = vld [vmem:[%s727 + $0x20] sm:$0xf]
        %v1271 = vld [vmem:[%s727 + $0x24] sm:$0xf]
        %v1272 = vld [vmem:[%s727 + $0x28] sm:$0xf]
        %v1273 = vld [vmem:[%s727 + $0x2c] sm:$0xf]
        %v1274 = vld [vmem:[%s727 + $0x30] sm:$0xf]
        %v1275 = vld [vmem:[%s727 + $0x34] sm:$0xf]
        %v1276 = vld [vmem:[%s727 + $0x38] sm:$0xf]
        %v1277 = vld [vmem:[%s727 + $0x3c] sm:$0xf]
        %v1278 = vperm.slane %v809, 0
        %v1295 = vunpack.c.l.b16 %v1262
        %v1296 = vunpack.c.l.b16 %v1263
        %v1297 = vunpack.c.l.b16 %v1264
        %v1298 = vunpack.c.l.b16 %v1265
        %v1299 = vunpack.c.l.b16 %v1266
        %v1300 = vunpack.c.l.b16 %v1267
        %v1301 = vunpack.c.l.b16 %v1268
        %v1302 = vunpack.c.l.b16 %v1269
        %v1303 = vunpack.c.l.b16 %v1270
        %v1304 = vunpack.c.l.b16 %v1271
        %v1305 = vunpack.c.l.b16 %v1272
        %v1306 = vunpack.c.l.b16 %v1273
        %v1307 = vunpack.c.l.b16 %v1274
        %v1308 = vunpack.c.l.b16 %v1275
        %v1309 = vunpack.c.l.b16 %v1276
        %v1310 = vunpack.c.l.b16 %v1277
        %v1311 = vpack.c.b16 %v1296, %v1295
        %v1312 = vpack.c.b16 %v1298, %v1297
        %v1313 = vpack.c.b16 %v1300, %v1299
        %v1314 = vpack.c.b16 %v1302, %v1301
        %v1315 = vpack.c.b16 %v1304, %v1303
        %v1316 = vpack.c.b16 %v1306, %v1305
        %v1317 = vpack.c.b16 %v1308, %v1307
        %v1318 = vpack.c.b16 %v1310, %v1309
        %1327 = vmatpush.bf16.msra.mxu0 %v1318
        %1328 = vmatpush.bf16.msra.mxu0 %v1317
        %1329 = vmatpush.bf16.msra.mxu0 %v1316
        %1330 = vmatpush.bf16.msra.mxu0 %v1315
        %1331 = vmatpush.bf16.msra.mxu0 %v1314
        %1332 = vmatpush.bf16.msra.mxu0 %v1313
        %1333 = vmatpush.bf16.msra.mxu0 %v1312
        %1334 = vmatpush.bf16.msra.mxu0 %v1311
        %1335 = vmatmul.bf16.gmra.mxu0 %v1261
        %v1336 = vpop.f32.mrf.mxu0
        %v1337 = vadd.f32 %v1278, %v1336
        %v1338 = vpop.f32.mrf.mxu0
        %v1339 = vadd.f32 %v1278, %v1338
        %1340 = vdwg.mxu0
        %v1341 = vadd.f32 %v1337, %v807
        %v1342 = vadd.f32 %v1339, %v808
        %1343 = vadd.xlane.f32.xlu0 %v1341
        %v1344 = vpop.xlane.xlu0 %1343
        %1345 = vadd.xlane.f32.xlu0 %v1342
        %v1346 = vpop.xlane.xlu0 %1345
        %v1347 = vrcp.pop 128.0
        %v1348 = vmul.f32 128.0, %v1347
        %v1349 = vsub.f32 1.0, %v1348
        %v1350 = vmul.f32 %v1347, %v1349
        %v1351 = vadd.f32 %v1347, %v1350
        %vm1352 = vweird.f32 %v1347
        %v1353 = vsel %vm1352, %v1347, %v1351
        %v1354 = vmul.f32 %v1344, %v1353
        %v1355 = vmul.f32 %v1346, %v1353
        %v1356 = vsub.f32 %v1341, %v1354
        %v1357 = vsub.f32 %v1342, %v1355
        %v1358 = vmul.f32 %v1356, %v1356
        %v1359 = vmul.f32 %v1357, %v1357
        %1360 = vadd.xlane.f32.xlu0 %v1358
        %v1361 = vpop.xlane.xlu0 %1360
        %1362 = vadd.xlane.f32.xlu0 %v1359
        %v1363 = vpop.xlane.xlu0 %1362
        %v1364 = vmul.f32 %v1361, %v1353
        %v1365 = vmul.f32 %v1363, %v1353
        %v1366 = vadd.f32 %v1364, 1e-12
        %v1367 = vadd.f32 %v1365, 1e-12
        %v1368 = vrsqrt.pop %v1366
        %v1369 = vmul.f32 %v1368, %v1366
        %v1370 = vmul.f32 %v1369, %v1368
        %v1371 = vmul.f32 0.5, %v1370
        %v1372 = vsub.f32 1.5, %v1371
        %v1373 = vmul.f32 %v1368, %v1372
        %vm1374 = vweird.f32 %v1366
        %vm1375 = vweird.f32 %v1368
        %vm1376 = vmor %vm1374, %vm1375
        %v1377 = vsel %vm1376, %v1368, %v1373
        %v1378 = vrsqrt.pop %v1367
        %v1379 = vmul.f32 %v1378, %v1367
        %v1380 = vmul.f32 %v1379, %v1378
        %v1381 = vmul.f32 0.5, %v1380
        %v1382 = vsub.f32 1.5, %v1381
        %v1383 = vmul.f32 %v1378, %v1382
        %vm1384 = vweird.f32 %v1367
        %vm1385 = vweird.f32 %v1378
        %vm1386 = vmor %vm1384, %vm1385
        %v1387 = vsel %vm1386, %v1378, %v1383
        %v1388 = vmul.f32 %v1356, %v1377
        %v1389 = vmul.f32 %v1357, %v1387
        %v1390 = vperm.slane %v809, 1
        %v1391 = vmul.f32 %v1388, %v1390
        %v1392 = vmul.f32 %v1389, %v1390
        %v1393 = vperm.slane %v809, 2
        %v1394 = vadd.f32 %v1391, %v1393
        %v1395 = vadd.f32 %v1392, %v1393
        %v1396 = vpack.c.bf16 %v1395, %v1394
        %v1397 = vld [vmem:[%s608] sm:$0xff]
        %v1398 = vld [vmem:[%s608 + $0x8] sm:$0xff]
        %v1399 = vld [vmem:[%s608 + $0x10] sm:$0xff]
        %v1400 = vld [vmem:[%s608 + $0x18] sm:$0xff]
        %v1401 = vld [vmem:[%s608 + $0x20] sm:$0xff]
        %v1402 = vld [vmem:[%s608 + $0x28] sm:$0xff]
        %v1403 = vld [vmem:[%s608 + $0x30] sm:$0xff]
        %v1404 = vld [vmem:[%s608 + $0x38] sm:$0xff]
        %v1405 = vld [vmem:[%s608 + $0x40] sm:$0xff]
        %v1406 = vld [vmem:[%s608 + $0x48] sm:$0xff]
        %v1407 = vld [vmem:[%s608 + $0x50] sm:$0xff]
        %v1408 = vld [vmem:[%s608 + $0x58] sm:$0xff]
        %v1409 = vld [vmem:[%s608 + $0x60] sm:$0xff]
        %v1410 = vld [vmem:[%s608 + $0x68] sm:$0xff]
        %v1411 = vld [vmem:[%s608 + $0x70] sm:$0xff]
        %v1412 = vld [vmem:[%s608 + $0x78] sm:$0xff]
        %v1413 = vld [vmem:[%s731] sm:$0x3]
        %v1415 = vperm.slane %v1413, 0
        %v1416 = vperm.slane %v1413, 1
        %v1435 = vunpack.c.l.b16 %v1397
        %v1436 = vunpack.c.h.b16 %v1397
        %v1437 = vunpack.c.l.b16 %v1398
        %v1438 = vunpack.c.h.b16 %v1398
        %v1439 = vunpack.c.l.b16 %v1399
        %v1440 = vunpack.c.h.b16 %v1399
        %v1441 = vunpack.c.l.b16 %v1400
        %v1442 = vunpack.c.h.b16 %v1400
        %v1443 = vunpack.c.l.b16 %v1401
        %v1444 = vunpack.c.h.b16 %v1401
        %v1445 = vunpack.c.l.b16 %v1402
        %v1446 = vunpack.c.h.b16 %v1402
        %v1447 = vunpack.c.l.b16 %v1403
        %v1448 = vunpack.c.h.b16 %v1403
        %v1449 = vunpack.c.l.b16 %v1404
        %v1450 = vunpack.c.h.b16 %v1404
        %v1451 = vunpack.c.l.b16 %v1405
        %v1452 = vunpack.c.h.b16 %v1405
        %v1453 = vunpack.c.l.b16 %v1406
        %v1454 = vunpack.c.h.b16 %v1406
        %v1455 = vunpack.c.l.b16 %v1407
        %v1456 = vunpack.c.h.b16 %v1407
        %v1457 = vunpack.c.l.b16 %v1408
        %v1458 = vunpack.c.h.b16 %v1408
        %v1459 = vunpack.c.l.b16 %v1409
        %v1460 = vunpack.c.h.b16 %v1409
        %v1461 = vunpack.c.l.b16 %v1410
        %v1462 = vunpack.c.h.b16 %v1410
        %v1463 = vunpack.c.l.b16 %v1411
        %v1464 = vunpack.c.h.b16 %v1411
        %v1465 = vunpack.c.l.b16 %v1412
        %v1466 = vunpack.c.h.b16 %v1412
        %v1467 = vpack.c.b16 %v1437, %v1435
        %v1468 = vpack.c.b16 %v1438, %v1436
        %v1469 = vpack.c.b16 %v1441, %v1439
        %v1470 = vpack.c.b16 %v1442, %v1440
        %v1471 = vpack.c.b16 %v1445, %v1443
        %v1472 = vpack.c.b16 %v1446, %v1444
        %v1473 = vpack.c.b16 %v1449, %v1447
        %v1474 = vpack.c.b16 %v1450, %v1448
        %v1475 = vpack.c.b16 %v1453, %v1451
        %v1476 = vpack.c.b16 %v1454, %v1452
        %v1477 = vpack.c.b16 %v1457, %v1455
        %v1478 = vpack.c.b16 %v1458, %v1456
        %v1479 = vpack.c.b16 %v1461, %v1459
        %v1480 = vpack.c.b16 %v1462, %v1460
        %v1481 = vpack.c.b16 %v1465, %v1463
        %v1482 = vpack.c.b16 %v1466, %v1464
        %1499 = vmatpush.bf16.msra.mxu0 %v1481
        %1500 = vmatpush.bf16.msra.mxu0 %v1479
        %1501 = vmatpush.bf16.msra.mxu0 %v1477
        %1502 = vmatpush.bf16.msra.mxu0 %v1475
        %1503 = vmatpush.bf16.msra.mxu0 %v1473
        %1504 = vmatpush.bf16.msra.mxu0 %v1471
        %1505 = vmatpush.bf16.msra.mxu0 %v1469
        %1506 = vmatpush.bf16.msra.mxu0 %v1467
        %1507 = vmatmul.bf16.gmra.mxu0 %v1396
        %v1508 = vpop.f32.mrf.mxu0
        %v1509 = vadd.f32 %v1415, %v1508
        %v1510 = vpop.f32.mrf.mxu0
        %v1511 = vadd.f32 %v1415, %v1510
        %1512 = vdwg.mxu0
        %1513 = vmatpush.bf16.msra.mxu0 %v1482
        %1514 = vmatpush.bf16.msra.mxu0 %v1480
        %1515 = vmatpush.bf16.msra.mxu0 %v1478
        %1516 = vmatpush.bf16.msra.mxu0 %v1476
        %1517 = vmatpush.bf16.msra.mxu0 %v1474
        %1518 = vmatpush.bf16.msra.mxu0 %v1472
        %1519 = vmatpush.bf16.msra.mxu0 %v1470
        %1520 = vmatpush.bf16.msra.mxu0 %v1468
        %1521 = vmatmul.bf16.gmra.mxu0 %v1396
        %v1522 = vpop.f32.mrf.mxu0
        %v1523 = vadd.f32 %v1416, %v1522
        %v1524 = vpop.f32.mrf.mxu0
        %v1525 = vadd.f32 %v1416, %v1524
        %1526 = vdwg.mxu0
        %v1527 = vmul.f32 %v1509, 0.5
        %v1528 = vmul.f32 %v1523, 0.5
        %v1529 = vmul.f32 %v1511, 0.5
        %v1530 = vmul.f32 %v1525, 0.5
        %v1531 = vmul.f32 %v1509, 0.70710677
        %v1532 = vmul.f32 %v1523, 0.70710677
        %v1533 = vmul.f32 %v1511, 0.70710677
        %v1534 = vmul.f32 %v1525, 0.70710677
        %v1535 = vand.u32 2147483647, %v1531
        %v1536 = vand.u32 2147483647, %v1532
        %v1537 = vand.u32 2147483647, %v1533
        %v1538 = vand.u32 2147483647, %v1534
        %v1539 = vmul.f32 %v1535, 0.3275911
        %v1540 = vmul.f32 %v1536, 0.3275911
        %v1541 = vmul.f32 %v1537, 0.3275911
        %v1542 = vmul.f32 %v1538, 0.3275911
        %v1543 = vadd.f32 %v1539, 1.0
        %v1544 = vadd.f32 %v1540, 1.0
        %v1545 = vadd.f32 %v1541, 1.0
        %v1546 = vadd.f32 %v1542, 1.0
        %v1547 = vrcp.pop %v1543
        %v1548 = vmul.f32 %v1543, %v1547
        %v1549 = vsub.f32 1.0, %v1548
        %v1550 = vmul.f32 %v1547, %v1549
        %v1551 = vadd.f32 %v1547, %v1550
        %vm1552 = vweird.f32 %v1543
        %vm1553 = vweird.f32 %v1547
        %vm1554 = vmor %vm1552, %vm1553
        %v1555 = vsel %vm1554, %v1547, %v1551
        %v1556 = vand.u32 2147483647, %v1543
        %vm1557 = vcmp.eq.f32.partialorder %v1556, 8.507059e+37
        %v1558 = vand.u32 %v1543, 2147483648
        %v1559 = vor.u32 1.1754944e-38, %v1558
        %v1560 = vsel %vm1557, %v1559, %v1555
        %v1561 = vmul.f32 1.0, %v1560
        %v1562 = vrcp.pop %v1544
        %v1563 = vmul.f32 %v1544, %v1562
        %v1564 = vsub.f32 1.0, %v1563
        %v1565 = vmul.f32 %v1562, %v1564
        %v1566 = vadd.f32 %v1562, %v1565
        %vm1567 = vweird.f32 %v1544
        %vm1568 = vweird.f32 %v1562
        %vm1569 = vmor %vm1567, %vm1568
        %v1570 = vsel %vm1569, %v1562, %v1566
        %v1571 = vand.u32 2147483647, %v1544
        %vm1572 = vcmp.eq.f32.partialorder %v1571, 8.507059e+37
        %v1573 = vand.u32 %v1544, 2147483648
        %v1574 = vor.u32 1.1754944e-38, %v1573
        %v1575 = vsel %vm1572, %v1574, %v1570
        %v1576 = vmul.f32 1.0, %v1575
        %v1577 = vrcp.pop %v1545
        %v1578 = vmul.f32 %v1545, %v1577
        %v1579 = vsub.f32 1.0, %v1578
        %v1580 = vmul.f32 %v1577, %v1579
        %v1581 = vadd.f32 %v1577, %v1580
        %vm1582 = vweird.f32 %v1545
        %vm1583 = vweird.f32 %v1577
        %vm1584 = vmor %vm1582, %vm1583
        %v1585 = vsel %vm1584, %v1577, %v1581
        %v1586 = vand.u32 2147483647, %v1545
        %vm1587 = vcmp.eq.f32.partialorder %v1586, 8.507059e+37
        %v1588 = vand.u32 %v1545, 2147483648
        %v1589 = vor.u32 1.1754944e-38, %v1588
        %v1590 = vsel %vm1587, %v1589, %v1585
        %v1591 = vmul.f32 1.0, %v1590
        %v1592 = vrcp.pop %v1546
        %v1593 = vmul.f32 %v1546, %v1592
        %v1594 = vsub.f32 1.0, %v1593
        %v1595 = vmul.f32 %v1592, %v1594
        %v1596 = vadd.f32 %v1592, %v1595
        %vm1597 = vweird.f32 %v1546
        %vm1598 = vweird.f32 %v1592
        %vm1599 = vmor %vm1597, %vm1598
        %v1600 = vsel %vm1599, %v1592, %v1596
        %v1601 = vand.u32 2147483647, %v1546
        %vm1602 = vcmp.eq.f32.partialorder %v1601, 8.507059e+37
        %v1603 = vand.u32 %v1546, 2147483648
        %v1604 = vor.u32 1.1754944e-38, %v1603
        %v1605 = vsel %vm1602, %v1604, %v1600
        %v1606 = vmul.f32 1.0, %v1605
        %v1607 = vmul.f32 %v1561, 1.0614054
        %v1608 = vmul.f32 %v1576, 1.0614054
        %v1609 = vmul.f32 %v1591, 1.0614054
        %v1610 = vmul.f32 %v1606, 1.0614054
        %v1611 = vadd.f32 %v1607, -1.4531521
        %v1612 = vadd.f32 %v1608, -1.4531521
        %v1613 = vadd.f32 %v1609, -1.4531521
        %v1614 = vadd.f32 %v1610, -1.4531521
        %v1615 = vmul.f32 %v1561, %v1611
        %v1616 = vmul.f32 %v1576, %v1612
        %v1617 = vmul.f32 %v1591, %v1613
        %v1618 = vmul.f32 %v1606, %v1614
        %v1619 = vadd.f32 %v1615, 1.4214138
        %v1620 = vadd.f32 %v1616, 1.4214138
        %v1621 = vadd.f32 %v1617, 1.4214138
        %v1622 = vadd.f32 %v1618, 1.4214138
        %v1623 = vmul.f32 %v1561, %v1619
        %v1624 = vmul.f32 %v1576, %v1620
        %v1625 = vmul.f32 %v1591, %v1621
        %v1626 = vmul.f32 %v1606, %v1622
        %v1627 = vadd.f32 %v1623, -0.28449672
        %v1628 = vadd.f32 %v1624, -0.28449672
        %v1629 = vadd.f32 %v1625, -0.28449672
        %v1630 = vadd.f32 %v1626, -0.28449672
        %v1631 = vmul.f32 %v1561, %v1627
        %v1632 = vmul.f32 %v1576, %v1628
        %v1633 = vmul.f32 %v1591, %v1629
        %v1634 = vmul.f32 %v1606, %v1630
        %v1635 = vadd.f32 %v1631, 0.2548296
        %v1636 = vadd.f32 %v1632, 0.2548296
        %v1637 = vadd.f32 %v1633, 0.2548296
        %v1638 = vadd.f32 %v1634, 0.2548296
        %v1639 = vmul.f32 %v1561, %v1635
        %v1640 = vmul.f32 %v1576, %v1636
        %v1641 = vmul.f32 %v1591, %v1637
        %v1642 = vmul.f32 %v1606, %v1638
        %v1643 = vsub.f32 0.0, %v1535
        %v1644 = vsub.f32 0.0, %v1536
        %v1645 = vsub.f32 0.0, %v1537
        %v1646 = vsub.f32 0.0, %v1538
        %v1647 = vmul.f32 %v1643, %v1535
        %v1648 = vmul.f32 %v1644, %v1536
        %v1649 = vmul.f32 %v1645, %v1537
        %v1650 = vmul.f32 %v1646, %v1538
        %v1651 = vmul.f32 %v1647, 1.442695
        %v1652 = vpow.pop %v1651
        %v1653 = vmul.f32 %v1648, 1.442695
        %v1654 = vpow.pop %v1653
        %v1655 = vmul.f32 %v1649, 1.442695
        %v1656 = vpow.pop %v1655
        %v1657 = vmul.f32 %v1650, 1.442695
        %v1658 = vpow.pop %v1657
        %v1659 = vmul.f32 %v1639, %v1652
        %v1660 = vmul.f32 %v1640, %v1654
        %v1661 = vmul.f32 %v1641, %v1656
        %v1662 = vmul.f32 %v1642, %v1658
        %v1663 = vsub.f32 1.0, %v1659
        %v1664 = vsub.f32 1.0, %v1660
        %v1665 = vsub.f32 1.0, %v1661
        %v1666 = vsub.f32 1.0, %v1662
        %vm1667 = vcmp.lt.f32.partialorder %v1531, 0.0
        %vm1668 = vcmp.lt.f32.partialorder %v1532, 0.0
        %vm1669 = vcmp.lt.f32.partialorder %v1533, 0.0
        %vm1670 = vcmp.lt.f32.partialorder %v1534, 0.0
        %v1671 = vsub.f32 0.0, %v1663
        %v1672 = vsub.f32 0.0, %v1664
        %v1673 = vsub.f32 0.0, %v1665
        %v1674 = vsub.f32 0.0, %v1666
        %v1675 = vsel %vm1667, %v1671, %v1663
        %v1676 = vsel %vm1668, %v1672, %v1664
        %v1677 = vsel %vm1669, %v1673, %v1665
        %v1678 = vsel %vm1670, %v1674, %v1666
        %v1679 = vadd.f32 %v1675, 1.0
        %v1680 = vadd.f32 %v1676, 1.0
        %v1681 = vadd.f32 %v1677, 1.0
        %v1682 = vadd.f32 %v1678, 1.0
        %v1683 = vmul.f32 %v1527, %v1679
        %v1684 = vmul.f32 %v1528, %v1680
        %v1685 = vmul.f32 %v1529, %v1681
        %v1686 = vmul.f32 %v1530, %v1682
        %v1687 = vpack.c.bf16 %v1685, %v1683
        %v1688 = vpack.c.bf16 %v1686, %v1684
        %v1689 = vld [vmem:[%s618] sm:$0xf]
        %v1690 = vld [vmem:[%s618 + $0x4] sm:$0xf]
        %v1691 = vld [vmem:[%s618 + $0x8] sm:$0xf]
        %v1692 = vld [vmem:[%s618 + $0xc] sm:$0xf]
        %v1693 = vld [vmem:[%s618 + $0x10] sm:$0xf]
        %v1694 = vld [vmem:[%s618 + $0x14] sm:$0xf]
        %v1695 = vld [vmem:[%s618 + $0x18] sm:$0xf]
        %v1696 = vld [vmem:[%s618 + $0x1c] sm:$0xf]
        %v1697 = vld [vmem:[%s618 + $0x20] sm:$0xf]
        %v1698 = vld [vmem:[%s618 + $0x24] sm:$0xf]
        %v1699 = vld [vmem:[%s618 + $0x28] sm:$0xf]
        %v1700 = vld [vmem:[%s618 + $0x2c] sm:$0xf]
        %v1701 = vld [vmem:[%s618 + $0x30] sm:$0xf]
        %v1702 = vld [vmem:[%s618 + $0x34] sm:$0xf]
        %v1703 = vld [vmem:[%s618 + $0x38] sm:$0xf]
        %v1704 = vld [vmem:[%s618 + $0x3c] sm:$0xf]
        %v1705 = vld [vmem:[%s618 + $0x40] sm:$0xf]
        %v1706 = vld [vmem:[%s618 + $0x44] sm:$0xf]
        %v1707 = vld [vmem:[%s618 + $0x48] sm:$0xf]
        %v1708 = vld [vmem:[%s618 + $0x4c] sm:$0xf]
        %v1709 = vld [vmem:[%s618 + $0x50] sm:$0xf]
        %v1710 = vld [vmem:[%s618 + $0x54] sm:$0xf]
        %v1711 = vld [vmem:[%s618 + $0x58] sm:$0xf]
        %v1712 = vld [vmem:[%s618 + $0x5c] sm:$0xf]
        %v1713 = vld [vmem:[%s618 + $0x60] sm:$0xf]
        %v1714 = vld [vmem:[%s618 + $0x64] sm:$0xf]
        %v1715 = vld [vmem:[%s618 + $0x68] sm:$0xf]
        %v1716 = vld [vmem:[%s618 + $0x6c] sm:$0xf]
        %v1717 = vld [vmem:[%s618 + $0x70] sm:$0xf]
        %v1718 = vld [vmem:[%s618 + $0x74] sm:$0xf]
        %v1719 = vld [vmem:[%s618 + $0x78] sm:$0xf]
        %v1720 = vld [vmem:[%s618 + $0x7c] sm:$0xf]
        %v1721 = vperm.slane %v809, 3
        %v1754 = vunpack.c.l.b16 %v1689
        %v1755 = vunpack.c.l.b16 %v1690
        %v1756 = vunpack.c.l.b16 %v1691
        %v1757 = vunpack.c.l.b16 %v1692
        %v1758 = vunpack.c.l.b16 %v1693
        %v1759 = vunpack.c.l.b16 %v1694
        %v1760 = vunpack.c.l.b16 %v1695
        %v1761 = vunpack.c.l.b16 %v1696
        %v1762 = vunpack.c.l.b16 %v1697
        %v1763 = vunpack.c.l.b16 %v1698
        %v1764 = vunpack.c.l.b16 %v1699
        %v1765 = vunpack.c.l.b16 %v1700
        %v1766 = vunpack.c.l.b16 %v1701
        %v1767 = vunpack.c.l.b16 %v1702
        %v1768 = vunpack.c.l.b16 %v1703
        %v1769 = vunpack.c.l.b16 %v1704
        %v1770 = vunpack.c.l.b16 %v1705
        %v1771 = vunpack.c.l.b16 %v1706
        %v1772 = vunpack.c.l.b16 %v1707
        %v1773 = vunpack.c.l.b16 %v1708
        %v1774 = vunpack.c.l.b16 %v1709
        %v1775 = vunpack.c.l.b16 %v1710
        %v1776 = vunpack.c.l.b16 %v1711
        %v1777 = vunpack.c.l.b16 %v1712
        %v1778 = vunpack.c.l.b16 %v1713
        %v1779 = vunpack.c.l.b16 %v1714
        %v1780 = vunpack.c.l.b16 %v1715
        %v1781 = vunpack.c.l.b16 %v1716
        %v1782 = vunpack.c.l.b16 %v1717
        %v1783 = vunpack.c.l.b16 %v1718
        %v1784 = vunpack.c.l.b16 %v1719
        %v1785 = vunpack.c.l.b16 %v1720
        %v1786 = vpack.c.b16 %v1755, %v1754
        %v1787 = vpack.c.b16 %v1757, %v1756
        %v1788 = vpack.c.b16 %v1759, %v1758
        %v1789 = vpack.c.b16 %v1761, %v1760
        %v1790 = vpack.c.b16 %v1763, %v1762
        %v1791 = vpack.c.b16 %v1765, %v1764
        %v1792 = vpack.c.b16 %v1767, %v1766
        %v1793 = vpack.c.b16 %v1769, %v1768
        %v1794 = vpack.c.b16 %v1771, %v1770
        %v1795 = vpack.c.b16 %v1773, %v1772
        %v1796 = vpack.c.b16 %v1775, %v1774
        %v1797 = vpack.c.b16 %v1777, %v1776
        %v1798 = vpack.c.b16 %v1779, %v1778
        %v1799 = vpack.c.b16 %v1781, %v1780
        %v1800 = vpack.c.b16 %v1783, %v1782
        %v1801 = vpack.c.b16 %v1785, %v1784
        %1818 = vmatpush.bf16.msra.mxu0 %v1793
        %1819 = vmatpush.bf16.msra.mxu0 %v1792
        %1820 = vmatpush.bf16.msra.mxu0 %v1791
        %1821 = vmatpush.bf16.msra.mxu0 %v1790
        %1822 = vmatpush.bf16.msra.mxu0 %v1789
        %1823 = vmatpush.bf16.msra.mxu0 %v1788
        %1824 = vmatpush.bf16.msra.mxu0 %v1787
        %1825 = vmatpush.bf16.msra.mxu0 %v1786
        %1826 = vmatmul.bf16.gmra.mxu0 %v1687
        %v1827 = vpop.f32.mrf.mxu0
        %v1828 = vadd.f32 %v1721, %v1827
        %v1829 = vpop.f32.mrf.mxu0
        %v1830 = vadd.f32 %v1721, %v1829
        %1831 = vdwg.mxu0
        %1832 = vmatpush.bf16.msra.mxu0 %v1801
        %1833 = vmatpush.bf16.msra.mxu0 %v1800
        %1834 = vmatpush.bf16.msra.mxu0 %v1799
        %1835 = vmatpush.bf16.msra.mxu0 %v1798
        %1836 = vmatpush.bf16.msra.mxu0 %v1797
        %1837 = vmatpush.bf16.msra.mxu0 %v1796
        %1838 = vmatpush.bf16.msra.mxu0 %v1795
        %1839 = vmatpush.bf16.msra.mxu0 %v1794
        %1840 = vmatmul.bf16.gmra.mxu0 %v1688
        %v1841 = vpop.f32.mrf.mxu0
        %v1842 = vadd.f32 %v1828, %v1841
        %v1843 = vpop.f32.mrf.mxu0
        %v1844 = vadd.f32 %v1830, %v1843
        %1845 = vdwg.mxu0
        %v1846 = vadd.f32 %v1842, %v1394
        %v1847 = vadd.f32 %v1844, %v1395
        %1848 = vadd.xlane.f32.xlu0 %v1846
        %v1849 = vpop.xlane.xlu0 %1848
        %1850 = vadd.xlane.f32.xlu0 %v1847
        %v1851 = vpop.xlane.xlu0 %1850
        %v1852 = vmul.f32 %v1849, %v1353
        %v1853 = vmul.f32 %v1851, %v1353
        %v1854 = vsub.f32 %v1846, %v1852
        %v1855 = vsub.f32 %v1847, %v1853
        %v1856 = vmul.f32 %v1854, %v1854
        %v1857 = vmul.f32 %v1855, %v1855
        %1858 = vadd.xlane.f32.xlu0 %v1856
        %v1859 = vpop.xlane.xlu0 %1858
        %1860 = vadd.xlane.f32.xlu0 %v1857
        %v1861 = vpop.xlane.xlu0 %1860
        %v1862 = vmul.f32 %v1859, %v1353
        %v1863 = vmul.f32 %v1861, %v1353
        %v1864 = vadd.f32 %v1862, 1e-12
        %v1865 = vadd.f32 %v1863, 1e-12
        %v1866 = vrsqrt.pop %v1864
        %v1867 = vmul.f32 %v1866, %v1864
        %v1868 = vmul.f32 %v1867, %v1866
        %v1869 = vmul.f32 0.5, %v1868
        %v1870 = vsub.f32 1.5, %v1869
        %v1871 = vmul.f32 %v1866, %v1870
        %vm1872 = vweird.f32 %v1864
        %vm1873 = vweird.f32 %v1866
        %vm1874 = vmor %vm1872, %vm1873
        %v1875 = vsel %vm1874, %v1866, %v1871
        %v1876 = vrsqrt.pop %v1865
        %v1877 = vmul.f32 %v1876, %v1865
        %v1878 = vmul.f32 %v1877, %v1876
        %v1879 = vmul.f32 0.5, %v1878
        %v1880 = vsub.f32 1.5, %v1879
        %v1881 = vmul.f32 %v1876, %v1880
        %vm1882 = vweird.f32 %v1865
        %vm1883 = vweird.f32 %v1876
        %vm1884 = vmor %vm1882, %vm1883
        %v1885 = vsel %vm1884, %v1876, %v1881
        %v1886 = vmul.f32 %v1854, %v1875
        %v1887 = vmul.f32 %v1855, %v1885
        %v1888 = vperm.slane %v809, 4
        %v1889 = vmul.f32 %v1886, %v1888
        %v1890 = vmul.f32 %v1887, %v1888
        %v1891 = vperm.slane %v809, 5
        %v1892 = vadd.f32 %v1889, %v1891
        %v1893 = vadd.f32 %v1890, %v1891
        %1894 = vst [vmem:[#allocation2] sm:$0xff] %v1892
        %1895 = vst [vmem:[#allocation2 + $0x8] sm:$0xff] %v1893
        %p1896 = scmp.eq.s32.totalorder %s38, 1
        // Predicated region
        $region101: #{dialogue_act_slot_value_forward.1} parent=79 // pred_check
          %p1897 = pneg %p1896
        $region102: #{dialogue_act_slot_value_forward.1} parent=79 // pred_check_branch
          %1899 = sbr.rel (%p1897) target = $region104
        $region103: #{dialogue_act_slot_value_forward.1} parent=79 // pred_region
          %v1901 = vrot.slane %v1893, 7
          %vm1903 = vcmask 1040384
          %v1904 = vsel %vm1903, %v1892, %v1901
          %v1905 = vpack.c.bf16 %v1904, %v1904
          %v1906 = vld [vmem:[%s11] sm:$0xf]
          %v1907 = vld [vmem:[%s11 + $0x4] sm:$0xf]
          %v1908 = vld [vmem:[%s11 + $0x8] sm:$0xf]
          %v1909 = vld [vmem:[%s11 + $0xc] sm:$0xf]
          %v1910 = vld [vmem:[%s11 + $0x10] sm:$0xf]
          %v1911 = vld [vmem:[%s11 + $0x14] sm:$0xf]
          %v1912 = vld [vmem:[%s11 + $0x18] sm:$0xf]
          %v1913 = vld [vmem:[%s11 + $0x1c] sm:$0xf]
          %v1914 = vld [vmem:[%s11 + $0x20] sm:$0xf]
          %v1915 = vld [vmem:[%s11 + $0x24] sm:$0xf]
          %v1916 = vld [vmem:[%s11 + $0x28] sm:$0xf]
          %v1917 = vld [vmem:[%s11 + $0x2c] sm:$0xf]
          %v1918 = vld [vmem:[%s11 + $0x30] sm:$0xf]
          %v1919 = vld [vmem:[%s11 + $0x34] sm:$0xf]
          %v1920 = vld [vmem:[%s11 + $0x38] sm:$0xf]
          %v1921 = vld [vmem:[%s11 + $0x3c] sm:$0xf]
          %v1922 = vld [vmem:[%s12] sm:$0x1]
          %v1924 = vperm.slane %v1922, 0
          %v1942 = vunpack.c.l.b16 %v1906
          %v1943 = vunpack.c.l.b16 %v1907
          %v1944 = vunpack.c.l.b16 %v1908
          %v1945 = vunpack.c.l.b16 %v1909
          %v1946 = vunpack.c.l.b16 %v1910
          %v1947 = vunpack.c.l.b16 %v1911
          %v1948 = vunpack.c.l.b16 %v1912
          %v1949 = vunpack.c.l.b16 %v1913
          %v1950 = vunpack.c.l.b16 %v1914
          %v1951 = vunpack.c.l.b16 %v1915
          %v1952 = vunpack.c.l.b16 %v1916
          %v1953 = vunpack.c.l.b16 %v1917
          %v1954 = vunpack.c.l.b16 %v1918
          %v1955 = vunpack.c.l.b16 %v1919
          %v1956 = vunpack.c.l.b16 %v1920
          %v1957 = vunpack.c.l.b16 %v1921
          %v1958 = vpack.c.b16 %v1943, %v1942
          %v1959 = vpack.c.b16 %v1945, %v1944
          %v1960 = vpack.c.b16 %v1947, %v1946
          %v1961 = vpack.c.b16 %v1949, %v1948
          %v1962 = vpack.c.b16 %v1951, %v1950
          %v1963 = vpack.c.b16 %v1953, %v1952
          %v1964 = vpack.c.b16 %v1955, %v1954
          %v1965 = vpack.c.b16 %v1957, %v1956
          %1974 = vmatpush.bf16.msra.mxu0 %v1965
          %1975 = vmatpush.bf16.msra.mxu0 %v1964
          %1976 = vmatpush.bf16.msra.mxu0 %v1963
          %1977 = vmatpush.bf16.msra.mxu0 %v1962
          %1978 = vmatpush.bf16.msra.mxu0 %v1961
          %1979 = vmatpush.bf16.msra.mxu0 %v1960
          %1980 = vmatpush.bf16.msra.mxu0 %v1959
          %1981 = vmatpush.bf16.msra.mxu0 %v1958
          %1982 = vmatmul.bf16.gmra.mxu0 %v1905
          %v1983 = vpop.f32.mrf.mxu0
          %v1984 = vadd.f32 %v1924, %v1983
          %v1985 = vpop.f32.mrf.mxu0
          %1986 = vdwg.mxu0
          %v1987 = vtanh.pop %v1984
          %v1988 = vpack.c.bf16 %v1987, %v1987
          %v1989 = vld [vmem:[#allocation8] sm:$0xf]
          %v1990 = vld [vmem:[#allocation8 + $0x4] sm:$0xf]
          %v1991 = vld [vmem:[#allocation8 + $0x8] sm:$0xf]
          %v1992 = vld [vmem:[#allocation8 + $0xc] sm:$0xf]
          %v1993 = vld [vmem:[#allocation8 + $0x10] sm:$0xf]
          %v1994 = vld [vmem:[#allocation8 + $0x14] sm:$0xf]
          %v1995 = vld [vmem:[#allocation8 + $0x18] sm:$0xf]
          %v1996 = vld [vmem:[#allocation8 + $0x1c] sm:$0xf]
          %v1997 = vld [vmem:[#allocation8 + $0x20] sm:$0xf]
          %v1998 = vld [vmem:[#allocation8 + $0x24] sm:$0xf]
          %v1999 = vld [vmem:[#allocation8 + $0x28] sm:$0xf]
          %v2000 = vld [vmem:[#allocation8 + $0x2c] sm:$0xf]
          %v2001 = vld [vmem:[#allocation8 + $0x30] sm:$0xf]
          %v2002 = vld [vmem:[#allocation8 + $0x34] sm:$0xf]
          %v2003 = vld [vmem:[#allocation8 + $0x38] sm:$0xf]
          %v2004 = vld [vmem:[#allocation8 + $0x3c] sm:$0xf]
          %v2005 = vld [vmem:[%s14] sm:$0x1]
          %v2007 = vperm.slane %v2005, 0
          %v2025 = vunpack.c.l.b16 %v1989
          %v2026 = vunpack.c.l.b16 %v1990
          %v2027 = vunpack.c.l.b16 %v1991
          %v2028 = vunpack.c.l.b16 %v1992
          %v2029 = vunpack.c.l.b16 %v1993
          %v2030 = vunpack.c.l.b16 %v1994
          %v2031 = vunpack.c.l.b16 %v1995
          %v2032 = vunpack.c.l.b16 %v1996
          %v2033 = vunpack.c.l.b16 %v1997
          %v2034 = vunpack.c.l.b16 %v1998
          %v2035 = vunpack.c.l.b16 %v1999
          %v2036 = vunpack.c.l.b16 %v2000
          %v2037 = vunpack.c.l.b16 %v2001
          %v2038 = vunpack.c.l.b16 %v2002
          %v2039 = vunpack.c.l.b16 %v2003
          %v2040 = vunpack.c.l.b16 %v2004
          %v2041 = vpack.c.b16 %v2026, %v2025
          %v2042 = vpack.c.b16 %v2028, %v2027
          %v2043 = vpack.c.b16 %v2030, %v2029
          %v2044 = vpack.c.b16 %v2032, %v2031
          %v2045 = vpack.c.b16 %v2034, %v2033
          %v2046 = vpack.c.b16 %v2036, %v2035
          %v2047 = vpack.c.b16 %v2038, %v2037
          %v2048 = vpack.c.b16 %v2040, %v2039
          %2057 = vmatpush.bf16.msra.mxu0 %v2048
          %2058 = vmatpush.bf16.msra.mxu0 %v2047
          %2059 = vmatpush.bf16.msra.mxu0 %v2046
          %2060 = vmatpush.bf16.msra.mxu0 %v2045
          %2061 = vmatpush.bf16.msra.mxu0 %v2044
          %2062 = vmatpush.bf16.msra.mxu0 %v2043
          %2063 = vmatpush.bf16.msra.mxu0 %v2042
          %2064 = vmatpush.bf16.msra.mxu0 %v2041
          %2065 = vmatmul.bf16.gmra.mxu0 %v1988
          %v2066 = vpop.f32.mrf.mxu0
          %v2067 = vadd.f32 %v2007, %v2066
          %v2068 = vpop.f32.mrf.mxu0
          %2069 = vdwg.mxu0
          %2070 = vst [vmem:[%s739] sm:$0x3] %v2067
        $region104: #{dialogue_act_slot_value_forward.1} parent=79 // pred_fallthru
          _
        %p2071 = scmp.lt.s32.totalorder %s37, 0
        %s2072 = scalar_select %p2071, %s37, 0
        %s2073 = smul.addr %s2072, 2
        %s2074 = scalar_lea.vmem %s15, %s2073
        // Predicated region
        $region105: #{dialogue_act_slot_value_forward.1} parent=79 // pred_check
          %p2075 = pneg %p423
        $region106: #{dialogue_act_slot_value_forward.1} parent=79 // pred_check_branch
          %2077 = sbr.rel (%p2075) target = $region108
        $region107: #{dialogue_act_slot_value_forward.1} parent=79 // pred_region
          _
        $region108: #{dialogue_act_slot_value_forward.1} parent=79 // pred_fallthru
          _
        // Predicated region
        $region109: #{dialogue_act_slot_value_forward.1} parent=79 // pred_check
          %p2078 = pneg %p423
        $region110: #{dialogue_act_slot_value_forward.1} parent=79 // pred_check_branch
          %2080 = sbr.rel (%p2078) target = $region112
        $region111: #{dialogue_act_slot_value_forward.1} parent=79 // pred_region
          %p2081 = scmp.lt.s32.totalorder %s37, 0
          %s2082 = scalar_select %p2081, %s37, 0
          %s2083 = smul.addr %s2082, 2
          %s2084 = scalar_lea.vmem %s15, %s2083
        $region112: #{dialogue_act_slot_value_forward.1} parent=79 // pred_fallthru
          _
      $region80: #{dialogue_act_slot_value_forward.1} parent=5 // pred_fallthru
        _
      %p2085 = scmp.le.s32.totalorder 2, %s28
      // Predicated region
      $region113: #{dialogue_act_slot_value_forward.1} parent=5 // pred_check
        %p2086 = pneg %p2085
      $region114: #{dialogue_act_slot_value_forward.1} parent=5 // pred_check_branch
        %2088 = sbr.rel (%p2086) target = $region116
      $region115: #{dialogue_act_slot_value_forward.1} parent=5 // pred_region
        %s2089 = ssub.s32 %s28, 2
      $region116: #{dialogue_act_slot_value_forward.1} parent=5 // pred_fallthru
        _
    $region6: #{dialogue_act_slot_value_forward.1} parent=1 // loop_footer
      %s32 = sadd.s32 1, %s28
    $region7: #{dialogue_act_slot_value_forward.1} parent=1 // loop_footer_branch
      %27 = sbr.rel target = $region3
    $region8: #{dialogue_act_slot_value_forward.1} parent=1 // loop_exit
      _
    %2090 = vsyncpa [#allocation4], 1
    %s2091 = scalar_lea.sflag [#allocation4], 1
    %2092 = vsyncpa %s2091, 1
    %2093 = vsyncpa [#allocation6], 1
    %s2094 = scalar_lea.sflag [#allocation6], 1
    %2095 = vsyncpa %s2094, 1
    %2096 = vsyncpa [#allocation9], 1

</llo_original>
